<compile_context>
chip_gen: v6e
topology: v6e:2x2x1
jax: 0.10.0
libtpu: 0.0.40
codegen_flags: <defaults>
</compile_context>

<pallas_src>
import math

import jax
import jax.numpy as jnp
from jax.experimental import pallas as pl
from jax.experimental.pallas import tpu as pltpu


_UNROLL_LIMIT = 32  # full Python unroll only for small static T


# ----------------------------- Pallas kernel ------------------------------- #

def _activate(gates, hdim):
    """Gate activations for packed gate order [i, f, o, g].

    The i/f/o columns of all weights/biases were pre-scaled by 0.5 at pack
    time, so sigmoid(z) = 0.5*tanh(z/2)+0.5 needs only the SAME tanh that the
    g column needs: one EUP launch over the whole (1, 4*hdim) row.
    """
    t = jnp.tanh(gates)
    sig = t[:, : 3 * hdim] * 0.5 + 0.5
    i = sig[:, 0 * hdim:1 * hdim]
    f = sig[:, 1 * hdim:2 * hdim]
    o = sig[:, 2 * hdim:3 * hdim]
    g = t[:, 3 * hdim:]
    return i, f, o, g


def encoder_kernel(x_ref, wih1_ref, whh1_ref, b1_ref, w2_ref, b2_ref, out_ref):
    # x_ref:    (T, 1)          f32  input sequence (n_features == 1)
    # wih1_ref: (1, 4*H1)       f32  layer-1 input weights  (gate order i,f,o,g;
    #                                i/f/o columns pre-scaled by 0.5)
    # whh1_ref: (H1, 4*H1)      bf16 layer-1 recurrent weights (same packing)
    # b1_ref:   (1, 4*H1)       f32  fused layer-1 bias (b_ih + b_hh, packed)
    # w2_ref:   (H1+H2, 4*H2)   bf16 fused layer-2 weights [wih2; whh2] (packed)
    # b2_ref:   (1, 4*H2)       f32  fused layer-2 bias (packed)
    # out_ref:  (1, H2)         f32  final hidden state of layer 2
    T = x_ref.shape[0]
    H1 = whh1_ref.shape[0]
    H2 = out_ref.shape[1]
    mxu_dt = whh1_ref.dtype

    def cell(xw1_row, h1, c1, h2, c2):
        # ---- layer 1: only the recurrent projection touches the MXU ----
        gates1 = xw1_row + jnp.dot(h1.astype(mxu_dt), whh1_ref[...],
                                   preferred_element_type=jnp.float32)
        i1, f1, o1, g1 = _activate(gates1, H1)
        c1 = f1 * c1 + i1 * g1
        h1 = o1 * jnp.tanh(c1)

        # ---- layer 2: single fused dot  [h1 | h2_prev] @ [wih2; whh2] ----
        lhs2 = jnp.concatenate([h1, h2], axis=1).astype(mxu_dt)
        gates2 = jnp.dot(lhs2, w2_ref[...],
                         preferred_element_type=jnp.float32) + b2_ref[...]
        i2, f2, o2, g2 = _activate(gates2, H2)
        c2 = f2 * c2 + i2 * g2
        h2 = o2 * jnp.tanh(c2)
        return h1, c1, h2, c2

    h1 = jnp.zeros((1, H1), jnp.float32)
    c1 = jnp.zeros((1, H1), jnp.float32)
    h2 = jnp.zeros((1, H2), jnp.float32)
    c2 = jnp.zeros((1, H2), jnp.float32)

    if T <= _UNROLL_LIMIT:
        # Layer-1 input projection (+ fused bias) hoisted out of the
        # recurrence as a VPU broadcast FMA (n_features == 1 makes the dot a
        # degenerate K=1 matmul). Kept as an in-register value (~2 vregs).
        xw1 = x_ref[...] * wih1_ref[...] + b1_ref[...]      # (T, 4*H1) f32
        # T is a small static constant: a Python loop is a guaranteed full
        # unroll; row t is a static sublane slice of the in-register value.
        for t in range(T):
            h1, c1, h2, c2 = cell(xw1[t:t + 1, :], h1, c1, h2, c2)
    else:
        # Guarded fallback: partial-unrolled fori_loop so a large T cannot
        # explode code size / vreg live ranges. The per-step input projection
        # is recomputed with a cheap VPU broadcast from a dynamic ref read.
        wih1 = wih1_ref[...]
        b1 = b1_ref[...]

        def body(t, carry):
            row = x_ref[pl.ds(t, 1), :] * wih1 + b1
            return cell(row, *carry)

        h1, c1, h2, c2 = jax.lax.fori_loop(0, T, body, (h1, c1, h2, c2),
                                           unroll=4)

    out_ref[...] = h2


# ------------------------------ JAX wrapper -------------------------------- #

def encoder_forward(x, packed_params, *, seq_len, n_features, embedding_dim):
    """Pallas-backed forward matching the PyTorch Encoder.forward."""
    # The PyTorch module's final reshape is only valid for n_features == 1.
    assert n_features == 1, "Encoder's final reshape requires n_features == 1"
    wih1, whh1, b1, w2, b2 = packed_params
    x2d = x.reshape(seq_len, n_features).astype(jnp.float32)

    vmem = pl.BlockSpec(memory_space=pltpu.MemorySpace.VMEM)
    out = pl.pallas_call(
        encoder_kernel,
        out_shape=jax.ShapeDtypeStruct((1, embedding_dim), jnp.float32),
        in_specs=[vmem] * 6,
        out_specs=vmem,
    )(x2d, wih1, whh1, b1, w2, b2)

    # hidden_n.reshape((n_features, embedding_dim)) — valid since n_features==1
    return out.reshape(n_features, embedding_dim)


# --------------------------- parameter packing ----------------------------- #

def _to_ifog(w_t, hdim):
    """Permute the trailing 4*hdim gate axis from PyTorch [i,f,g,o] to [i,f,o,g]."""
    return jnp.concatenate(
        [w_t[..., 0 * hdim:2 * hdim],    # i, f
         w_t[..., 3 * hdim:4 * hdim],    # o
         w_t[..., 2 * hdim:3 * hdim]],   # g
        axis=-1)


def _fold_half(w_t, hdim):
    """Pre-scale the (already permuted) i/f/o columns by 0.5.

    Lets the kernel use sigmoid(z) = 0.5*tanh(z/2)+0.5 with a single tanh over
    the whole gate row. Exact: scaling by a power of two commutes with the
    bf16 cast and the f32-accumulated dot.
    """
    return jnp.concatenate([w_t[..., : 3 * hdim] * 0.5, w_t[..., 3 * hdim:]],
                           axis=-1)


def pack_params(w_ih1, w_hh1, b_ih1, b_hh1, w_ih2, w_hh2, b_ih2, b_hh2,
                *, matmul_dtype=jnp.bfloat16):
    """Repack PyTorch-layout LSTM weights for the kernel.

    - transpose to (in_dim, 4*hidden) so gate projections are row @ matrix
    - permute gate columns [i,f,g,o] -> [i,f,o,g]; pre-scale i/f/o by 0.5
    - fuse b_ih + b_hh
    - fuse layer-2 weights: W2 = [wih2; whh2] -> (H1+H2, 4*H2)
    - recurrent-path matmul weights in bf16; layer-1 input weight and biases
      stay f32 (used on the VPU, where all element-wise math is f32)
    """
    hdim1 = w_hh1.shape[1]
    hdim2 = w_hh2.shape[1]
    prep1 = lambda a: _fold_half(_to_ifog(a, hdim1), hdim1)
    prep2 = lambda a: _fold_half(_to_ifog(a, hdim2), hdim2)

    wih1 = prep1(w_ih1.T.astype(jnp.float32))                         # (F, 4H1) f32
    whh1 = prep1(w_hh1.T.astype(jnp.float32)).astype(matmul_dtype)    # (H1, 4H1) bf16
    b1 = prep1((b_ih1 + b_hh1)[None, :].astype(jnp.float32))          # (1, 4H1) f32

    w2 = jnp.concatenate([w_ih2.T.astype(jnp.float32),
                          w_hh2.T.astype(jnp.float32)], axis=0)       # (H1+H2, 4H2)
    w2 = prep2(w2).astype(matmul_dtype)
    b2 = prep2((b_ih2 + b_hh2)[None, :].astype(jnp.float32))          # (1, 4H2) f32

    return wih1, whh1, b1, w2, b2


def init_raw_params(key, n_features, embedding_dim):
    """Deterministic PyTorch-style LSTM init, returned in raw PyTorch layout."""
    hidden_dim = 2 * embedding_dim
    ks = jax.random.split(key, 8)

    def u(k, shape, bound):
        return jax.random.uniform(k, shape, jnp.float32, -bound, bound)

    k1 = 1.0 / math.sqrt(hidden_dim)
    w_ih1 = u(ks[0], (4 * hidden_dim, n_features), k1)   # PyTorch layout
    w_hh1 = u(ks[1], (4 * hidden_dim, hidden_dim), k1)
    b_ih1 = u(ks[2], (4 * hidden_dim,), k1)
    b_hh1 = u(ks[3], (4 * hidden_dim,), k1)

    k2 = 1.0 / math.sqrt(embedding_dim)
    w_ih2 = u(ks[4], (4 * embedding_dim, hidden_dim), k2)
    w_hh2 = u(ks[5], (4 * embedding_dim, embedding_dim), k2)
    b_ih2 = u(ks[6], (4 * embedding_dim,), k2)
    b_hh2 = u(ks[7], (4 * embedding_dim,), k2)

    return (w_ih1, w_hh1, b_ih1, b_hh1, w_ih2, w_hh2, b_ih2, b_hh2)


# ------------------------------- reference --------------------------------- #

def encoder_reference(x, raw_params, *, seq_len, n_features, embedding_dim,
                      matmul_dtype=jnp.bfloat16):
    """Pure-JAX reference on RAW PyTorch-layout weights (standard gate order,
    jax.nn.sigmoid), so it independently checks the packing / gate permutation
    / bias fusion / 0.5-fold / layer-2 weight concat done for the kernel.

    It uses bf16 operands for the recurrent dots to match the kernel's MXU
    numerics; NOTE: vs. a true f32 PyTorch LSTM, bf16 weight rounding compounds
    through the T-step recurrence (expect ~1e-2-level drift, by design).
    """
    (w_ih1, w_hh1, b_ih1, b_hh1, w_ih2, w_hh2, b_ih2, b_hh2) = raw_params
    H1, H2 = 2 * embedding_dim, embedding_dim
    x2d = x.reshape(seq_len, n_features).astype(jnp.float32)

    def lstm_step(h, c, gates, hdim):
        # PyTorch gate order: [i, f, g, o]
        i = jax.nn.sigmoid(gates[:, 0 * hdim:1 * hdim])
        f = jax.nn.sigmoid(gates[:, 1 * hdim:2 * hdim])
        g = jnp.tanh(gates[:, 2 * hdim:3 * hdim])
        o = jax.nn.sigmoid(gates[:, 3 * hdim:4 * hdim])
        c = f * c + i * g
        h = o * jnp.tanh(c)
        return h, c

    wih1 = w_ih1.T.astype(jnp.float32)
    whh1 = w_hh1.T.astype(matmul_dtype)
    wih2 = w_ih2.T.astype(matmul_dtype)
    whh2 = w_hh2.T.astype(matmul_dtype)
    b1 = (b_ih1 + b_hh1)[None, :].astype(jnp.float32)
    b2 = (b_ih2 + b_hh2)[None, :].astype(jnp.float32)

    h1 = jnp.zeros((1, H1), jnp.float32)
    c1 = jnp.zeros((1, H1), jnp.float32)
    h2 = jnp.zeros((1, H2), jnp.float32)
    c2 = jnp.zeros((1, H2), jnp.float32)
    for t in range(seq_len):
        g1 = (jnp.dot(x2d[t:t + 1], wih1, preferred_element_type=jnp.float32)
              + jnp.dot(h1.astype(matmul_dtype), whh1,
                        preferred_element_type=jnp.float32)
              + b1)
        h1, c1 = lstm_step(h1, c1, g1, H1)

        g2 = (jnp.dot(h1.astype(matmul_dtype), wih2,
                      preferred_element_type=jnp.float32)
              + jnp.dot(h2.astype(matmul_dtype), whh2,
                        preferred_element_type=jnp.float32)
              + b2)
        h2, c2 = lstm_step(h2, c2, g2, H2)
    return h2.reshape(n_features, embedding_dim)


if __name__ == "__main__":
    # Small shapes consistent with the module's forward (n_features must be 1
    # for the final reshape to be valid, exactly as in the PyTorch code).
    seq_len, n_features, embedding_dim = 8, 1, 32

    key = jax.random.PRNGKey(0)
    k_x, k_p = jax.random.split(key)
    x = jax.random.normal(k_x, (seq_len, n_features), jnp.float32)

    raw_params = init_raw_params(k_p, n_features, embedding_dim)
    packed_params = pack_params(*raw_params)

    out = encoder_forward(x, packed_params, seq_len=seq_len,
                          n_features=n_features, embedding_dim=embedding_dim)
    out = jax.block_until_ready(out)

    ref = encoder_reference(x, raw_params, seq_len=seq_len,
                            n_features=n_features,
                            embedding_dim=embedding_dim)
    assert out.shape == (n_features, embedding_dim)
    # Kernel and reference share bf16 MXU numerics; remaining differences are
    # the exact sigmoid-via-tanh identity and dot accumulation order.
    assert jnp.allclose(out, ref, atol=5e-4, rtol=5e-4), "mismatch vs reference"

    print("KERNEL_OK")
</pallas_src>

<mosaic_0001>
module attributes {stable_mosaic.version = 11 : i64} {
  func.func @encoder_kernel(%arg0: memref<8x1xf32, #tpu.memory_space<vmem>>, %arg1: memref<1x256xf32, #tpu.memory_space<vmem>>, %arg2: memref<64x256xbf16, #tpu.memory_space<vmem>>, %arg3: memref<1x256xf32, #tpu.memory_space<vmem>>, %arg4: memref<96x128xbf16, #tpu.memory_space<vmem>>, %arg5: memref<1x128xf32, #tpu.memory_space<vmem>>, %arg6: memref<1x32xf32, #tpu.memory_space<vmem>>) attributes {dimension_semantics = [], scalar_prefetch = 0 : i64, scratch_operands = 0 : i64, tpu.core_type = #tpu.core_type<tc>} {
    %cst = arith.constant 0.000000e+00 : f32
    %0 = vector.broadcast %cst : f32 to vector<1x64xf32>
    %cst_0 = arith.constant 0.000000e+00 : f32
    %1 = vector.broadcast %cst_0 : f32 to vector<1x64xf32>
    %cst_1 = arith.constant 0.000000e+00 : f32
    %2 = vector.broadcast %cst_1 : f32 to vector<1x32xf32>
    %cst_2 = arith.constant 0.000000e+00 : f32
    %3 = vector.broadcast %cst_2 : f32 to vector<1x32xf32>
    %c0 = arith.constant 0 : index
    %c0_3 = arith.constant 0 : index
    %4 = vector.load %arg0[%c0, %c0_3] : memref<8x1xf32, #tpu.memory_space<vmem>>, vector<8x1xf32>
    %c0_4 = arith.constant 0 : index
    %c0_5 = arith.constant 0 : index
    %5 = vector.load %arg1[%c0_4, %c0_5] : memref<1x256xf32, #tpu.memory_space<vmem>>, vector<1x256xf32>
    %6 = vector.broadcast %4 : vector<8x1xf32> to vector<8x256xf32>
    %7 = vector.broadcast %5 : vector<1x256xf32> to vector<8x256xf32>
    %8 = arith.mulf %6, %7 : vector<8x256xf32>
    %c0_6 = arith.constant 0 : index
    %c0_7 = arith.constant 0 : index
    %9 = vector.load %arg3[%c0_6, %c0_7] : memref<1x256xf32, #tpu.memory_space<vmem>>, vector<1x256xf32>
    %10 = vector.broadcast %9 : vector<1x256xf32> to vector<8x256xf32>
    %11 = arith.addf %8, %10 : vector<8x256xf32>
    %12 = vector.extract_strided_slice %11 {offsets = [0, 0], sizes = [1, 256], strides = [1, 1]} : vector<8x256xf32> to vector<1x256xf32>
    %13 = arith.truncf %0 : vector<1x64xf32> to vector<1x64xbf16>
    %c0_8 = arith.constant 0 : index
    %c0_9 = arith.constant 0 : index
    %14 = vector.load %arg2[%c0_8, %c0_9] : memref<64x256xbf16, #tpu.memory_space<vmem>>, vector<64x256xbf16>
    %cst_10 = arith.constant dense<0.000000e+00> : vector<1x256xf32>
    %15 = tpu.matmul %13, %14, %cst_10 {dimension_numbers = #tpu.dot_dimension_numbers<[1], [0], [0], [1], [0, 0, 1, 1], [], []>} : vector<1x64xbf16>, vector<64x256xbf16>, vector<1x256xf32> -> vector<1x256xf32>
    %16 = arith.addf %12, %15 : vector<1x256xf32>
    %17 = math.tanh %16 : vector<1x256xf32>
    %18 = vector.extract_strided_slice %17 {offsets = [0, 0], sizes = [1, 192], strides = [1, 1]} : vector<1x256xf32> to vector<1x192xf32>
    %cst_11 = arith.constant 5.000000e-01 : f32
    %19 = vector.broadcast %cst_11 : f32 to vector<1x192xf32>
    %20 = arith.mulf %18, %19 : vector<1x192xf32>
    %cst_12 = arith.constant 5.000000e-01 : f32
    %21 = vector.broadcast %cst_12 : f32 to vector<1x192xf32>
    %22 = arith.addf %20, %21 : vector<1x192xf32>
    %23 = vector.extract_strided_slice %22 {offsets = [0, 0], sizes = [1, 64], strides = [1, 1]} : vector<1x192xf32> to vector<1x64xf32>
    %24 = vector.extract_strided_slice %22 {offsets = [0, 64], sizes = [1, 64], strides = [1, 1]} : vector<1x192xf32> to vector<1x64xf32>
    %25 = vector.extract_strided_slice %22 {offsets = [0, 128], sizes = [1, 64], strides = [1, 1]} : vector<1x192xf32> to vector<1x64xf32>
    %26 = vector.extract_strided_slice %17 {offsets = [0, 192], sizes = [1, 64], strides = [1, 1]} : vector<1x256xf32> to vector<1x64xf32>
    %27 = arith.mulf %24, %1 : vector<1x64xf32>
    %28 = arith.mulf %23, %26 : vector<1x64xf32>
    %29 = arith.addf %27, %28 : vector<1x64xf32>
    %30 = math.tanh %29 : vector<1x64xf32>
    %31 = arith.mulf %25, %30 : vector<1x64xf32>
    %32 = tpu.concatenate %31, %2 in 1 : vector<1x64xf32>, vector<1x32xf32> -> vector<1x96xf32>
    %33 = arith.truncf %32 : vector<1x96xf32> to vector<1x96xbf16>
    %c0_13 = arith.constant 0 : index
    %c0_14 = arith.constant 0 : index
    %34 = vector.load %arg4[%c0_13, %c0_14] : memref<96x128xbf16, #tpu.memory_space<vmem>>, vector<96x128xbf16>
    %cst_15 = arith.constant dense<0.000000e+00> : vector<1x128xf32>
    %35 = tpu.matmul %33, %34, %cst_15 {dimension_numbers = #tpu.dot_dimension_numbers<[1], [0], [0], [1], [0, 0, 1, 1], [], []>} : vector<1x96xbf16>, vector<96x128xbf16>, vector<1x128xf32> -> vector<1x128xf32>
    %c0_16 = arith.constant 0 : index
    %c0_17 = arith.constant 0 : index
    %36 = vector.load %arg5[%c0_16, %c0_17] : memref<1x128xf32, #tpu.memory_space<vmem>>, vector<1x128xf32>
    %37 = arith.addf %35, %36 : vector<1x128xf32>
    %38 = math.tanh %37 : vector<1x128xf32>
    %39 = vector.extract_strided_slice %38 {offsets = [0, 0], sizes = [1, 96], strides = [1, 1]} : vector<1x128xf32> to vector<1x96xf32>
    %cst_18 = arith.constant 5.000000e-01 : f32
    %40 = vector.broadcast %cst_18 : f32 to vector<1x96xf32>
    %41 = arith.mulf %39, %40 : vector<1x96xf32>
    %cst_19 = arith.constant 5.000000e-01 : f32
    %42 = vector.broadcast %cst_19 : f32 to vector<1x96xf32>
    %43 = arith.addf %41, %42 : vector<1x96xf32>
    %44 = vector.extract_strided_slice %43 {offsets = [0, 0], sizes = [1, 32], strides = [1, 1]} : vector<1x96xf32> to vector<1x32xf32>
    %45 = vector.extract_strided_slice %43 {offsets = [0, 32], sizes = [1, 32], strides = [1, 1]} : vector<1x96xf32> to vector<1x32xf32>
    %46 = vector.extract_strided_slice %43 {offsets = [0, 64], sizes = [1, 32], strides = [1, 1]} : vector<1x96xf32> to vector<1x32xf32>
    %47 = vector.extract_strided_slice %38 {offsets = [0, 96], sizes = [1, 32], strides = [1, 1]} : vector<1x128xf32> to vector<1x32xf32>
    %48 = arith.mulf %45, %3 : vector<1x32xf32>
    %49 = arith.mulf %44, %47 : vector<1x32xf32>
    %50 = arith.addf %48, %49 : vector<1x32xf32>
    %51 = math.tanh %50 : vector<1x32xf32>
    %52 = arith.mulf %46, %51 : vector<1x32xf32>
    %53 = vector.extract_strided_slice %11 {offsets = [1, 0], sizes = [1, 256], strides = [1, 1]} : vector<8x256xf32> to vector<1x256xf32>
    %54 = arith.truncf %31 : vector<1x64xf32> to vector<1x64xbf16>
    %c0_20 = arith.constant 0 : index
    %c0_21 = arith.constant 0 : index
    %55 = vector.load %arg2[%c0_20, %c0_21] : memref<64x256xbf16, #tpu.memory_space<vmem>>, vector<64x256xbf16>
    %cst_22 = arith.constant dense<0.000000e+00> : vector<1x256xf32>
    %56 = tpu.matmul %54, %55, %cst_22 {dimension_numbers = #tpu.dot_dimension_numbers<[1], [0], [0], [1], [0, 0, 1, 1], [], []>} : vector<1x64xbf16>, vector<64x256xbf16>, vector<1x256xf32> -> vector<1x256xf32>
    %57 = arith.addf %53, %56 : vector<1x256xf32>
    %58 = math.tanh %57 : vector<1x256xf32>
    %59 = vector.extract_strided_slice %58 {offsets = [0, 0], sizes = [1, 192], strides = [1, 1]} : vector<1x256xf32> to vector<1x192xf32>
    %cst_23 = arith.constant 5.000000e-01 : f32
    %60 = vector.broadcast %cst_23 : f32 to vector<1x192xf32>
    %61 = arith.mulf %59, %60 : vector<1x192xf32>
    %cst_24 = arith.constant 5.000000e-01 : f32
    %62 = vector.broadcast %cst_24 : f32 to vector<1x192xf32>
    %63 = arith.addf %61, %62 : vector<1x192xf32>
    %64 = vector.extract_strided_slice %63 {offsets = [0, 0], sizes = [1, 64], strides = [1, 1]} : vector<1x192xf32> to vector<1x64xf32>
    %65 = vector.extract_strided_slice %63 {offsets = [0, 64], sizes = [1, 64], strides = [1, 1]} : vector<1x192xf32> to vector<1x64xf32>
    %66 = vector.extract_strided_slice %63 {offsets = [0, 128], sizes = [1, 64], strides = [1, 1]} : vector<1x192xf32> to vector<1x64xf32>
    %67 = vector.extract_strided_slice %58 {offsets = [0, 192], sizes = [1, 64], strides = [1, 1]} : vector<1x256xf32> to vector<1x64xf32>
    %68 = arith.mulf %65, %29 : vector<1x64xf32>
    %69 = arith.mulf %64, %67 : vector<1x64xf32>
    %70 = arith.addf %68, %69 : vector<1x64xf32>
    %71 = math.tanh %70 : vector<1x64xf32>
    %72 = arith.mulf %66, %71 : vector<1x64xf32>
    %73 = tpu.concatenate %72, %52 in 1 : vector<1x64xf32>, vector<1x32xf32> -> vector<1x96xf32>
    %74 = arith.truncf %73 : vector<1x96xf32> to vector<1x96xbf16>
    %c0_25 = arith.constant 0 : index
    %c0_26 = arith.constant 0 : index
    %75 = vector.load %arg4[%c0_25, %c0_26] : memref<96x128xbf16, #tpu.memory_space<vmem>>, vector<96x128xbf16>
    %cst_27 = arith.constant dense<0.000000e+00> : vector<1x128xf32>
    %76 = tpu.matmul %74, %75, %cst_27 {dimension_numbers = #tpu.dot_dimension_numbers<[1], [0], [0], [1], [0, 0, 1, 1], [], []>} : vector<1x96xbf16>, vector<96x128xbf16>, vector<1x128xf32> -> vector<1x128xf32>
    %c0_28 = arith.constant 0 : index
    %c0_29 = arith.constant 0 : index
    %77 = vector.load %arg5[%c0_28, %c0_29] : memref<1x128xf32, #tpu.memory_space<vmem>>, vector<1x128xf32>
    %78 = arith.addf %76, %77 : vector<1x128xf32>
    %79 = math.tanh %78 : vector<1x128xf32>
    %80 = vector.extract_strided_slice %79 {offsets = [0, 0], sizes = [1, 96], strides = [1, 1]} : vector<1x128xf32> to vector<1x96xf32>
    %cst_30 = arith.constant 5.000000e-01 : f32
    %81 = vector.broadcast %cst_30 : f32 to vector<1x96xf32>
    %82 = arith.mulf %80, %81 : vector<1x96xf32>
    %cst_31 = arith.constant 5.000000e-01 : f32
    %83 = vector.broadcast %cst_31 : f32 to vector<1x96xf32>
    %84 = arith.addf %82, %83 : vector<1x96xf32>
    %85 = vector.extract_strided_slice %84 {offsets = [0, 0], sizes = [1, 32], strides = [1, 1]} : vector<1x96xf32> to vector<1x32xf32>
    %86 = vector.extract_strided_slice %84 {offsets = [0, 32], sizes = [1, 32], strides = [1, 1]} : vector<1x96xf32> to vector<1x32xf32>
    %87 = vector.extract_strided_slice %84 {offsets = [0, 64], sizes = [1, 32], strides = [1, 1]} : vector<1x96xf32> to vector<1x32xf32>
    %88 = vector.extract_strided_slice %79 {offsets = [0, 96], sizes = [1, 32], strides = [1, 1]} : vector<1x128xf32> to vector<1x32xf32>
    %89 = arith.mulf %86, %50 : vector<1x32xf32>
    %90 = arith.mulf %85, %88 : vector<1x32xf32>
    %91 = arith.addf %89, %90 : vector<1x32xf32>
    %92 = math.tanh %91 : vector<1x32xf32>
    %93 = arith.mulf %87, %92 : vector<1x32xf32>
    %94 = vector.extract_strided_slice %11 {offsets = [2, 0], sizes = [1, 256], strides = [1, 1]} : vector<8x256xf32> to vector<1x256xf32>
    %95 = arith.truncf %72 : vector<1x64xf32> to vector<1x64xbf16>
    %c0_32 = arith.constant 0 : index
    %c0_33 = arith.constant 0 : index
    %96 = vector.load %arg2[%c0_32, %c0_33] : memref<64x256xbf16, #tpu.memory_space<vmem>>, vector<64x256xbf16>
    %cst_34 = arith.constant dense<0.000000e+00> : vector<1x256xf32>
    %97 = tpu.matmul %95, %96, %cst_34 {dimension_numbers = #tpu.dot_dimension_numbers<[1], [0], [0], [1], [0, 0, 1, 1], [], []>} : vector<1x64xbf16>, vector<64x256xbf16>, vector<1x256xf32> -> vector<1x256xf32>
    %98 = arith.addf %94, %97 : vector<1x256xf32>
    %99 = math.tanh %98 : vector<1x256xf32>
    %100 = vector.extract_strided_slice %99 {offsets = [0, 0], sizes = [1, 192], strides = [1, 1]} : vector<1x256xf32> to vector<1x192xf32>
    %cst_35 = arith.constant 5.000000e-01 : f32
    %101 = vector.broadcast %cst_35 : f32 to vector<1x192xf32>
    %102 = arith.mulf %100, %101 : vector<1x192xf32>
    %cst_36 = arith.constant 5.000000e-01 : f32
    %103 = vector.broadcast %cst_36 : f32 to vector<1x192xf32>
    %104 = arith.addf %102, %103 : vector<1x192xf32>
    %105 = vector.extract_strided_slice %104 {offsets = [0, 0], sizes = [1, 64], strides = [1, 1]} : vector<1x192xf32> to vector<1x64xf32>
    %106 = vector.extract_strided_slice %104 {offsets = [0, 64], sizes = [1, 64], strides = [1, 1]} : vector<1x192xf32> to vector<1x64xf32>
    %107 = vector.extract_strided_slice %104 {offsets = [0, 128], sizes = [1, 64], strides = [1, 1]} : vector<1x192xf32> to vector<1x64xf32>
    %108 = vector.extract_strided_slice %99 {offsets = [0, 192], sizes = [1, 64], strides = [1, 1]} : vector<1x256xf32> to vector<1x64xf32>
    %109 = arith.mulf %106, %70 : vector<1x64xf32>
    %110 = arith.mulf %105, %108 : vector<1x64xf32>
    %111 = arith.addf %109, %110 : vector<1x64xf32>
    %112 = math.tanh %111 : vector<1x64xf32>
    %113 = arith.mulf %107, %112 : vector<1x64xf32>
    %114 = tpu.concatenate %113, %93 in 1 : vector<1x64xf32>, vector<1x32xf32> -> vector<1x96xf32>
    %115 = arith.truncf %114 : vector<1x96xf32> to vector<1x96xbf16>
    %c0_37 = arith.constant 0 : index
    %c0_38 = arith.constant 0 : index
    %116 = vector.load %arg4[%c0_37, %c0_38] : memref<96x128xbf16, #tpu.memory_space<vmem>>, vector<96x128xbf16>
    %cst_39 = arith.constant dense<0.000000e+00> : vector<1x128xf32>
    %117 = tpu.matmul %115, %116, %cst_39 {dimension_numbers = #tpu.dot_dimension_numbers<[1], [0], [0], [1], [0, 0, 1, 1], [], []>} : vector<1x96xbf16>, vector<96x128xbf16>, vector<1x128xf32> -> vector<1x128xf32>
    %c0_40 = arith.constant 0 : index
    %c0_41 = arith.constant 0 : index
    %118 = vector.load %arg5[%c0_40, %c0_41] : memref<1x128xf32, #tpu.memory_space<vmem>>, vector<1x128xf32>
    %119 = arith.addf %117, %118 : vector<1x128xf32>
    %120 = math.tanh %119 : vector<1x128xf32>
    %121 = vector.extract_strided_slice %120 {offsets = [0, 0], sizes = [1, 96], strides = [1, 1]} : vector<1x128xf32> to vector<1x96xf32>
    %cst_42 = arith.constant 5.000000e-01 : f32
    %122 = vector.broadcast %cst_42 : f32 to vector<1x96xf32>
    %123 = arith.mulf %121, %122 : vector<1x96xf32>
    %cst_43 = arith.constant 5.000000e-01 : f32
    %124 = vector.broadcast %cst_43 : f32 to vector<1x96xf32>
    %125 = arith.addf %123, %124 : vector<1x96xf32>
    %126 = vector.extract_strided_slice %125 {offsets = [0, 0], sizes = [1, 32], strides = [1, 1]} : vector<1x96xf32> to vector<1x32xf32>
    %127 = vector.extract_strided_slice %125 {offsets = [0, 32], sizes = [1, 32], strides = [1, 1]} : vector<1x96xf32> to vector<1x32xf32>
    %128 = vector.extract_strided_slice %125 {offsets = [0, 64], sizes = [1, 32], strides = [1, 1]} : vector<1x96xf32> to vector<1x32xf32>
    %129 = vector.extract_strided_slice %120 {offsets = [0, 96], sizes = [1, 32], strides = [1, 1]} : vector<1x128xf32> to vector<1x32xf32>
    %130 = arith.mulf %127, %91 : vector<1x32xf32>
    %131 = arith.mulf %126, %129 : vector<1x32xf32>
    %132 = arith.addf %130, %131 : vector<1x32xf32>
    %133 = math.tanh %132 : vector<1x32xf32>
    %134 = arith.mulf %128, %133 : vector<1x32xf32>
    %135 = vector.extract_strided_slice %11 {offsets = [3, 0], sizes = [1, 256], strides = [1, 1]} : vector<8x256xf32> to vector<1x256xf32>
    %136 = arith.truncf %113 : vector<1x64xf32> to vector<1x64xbf16>
    %c0_44 = arith.constant 0 : index
    %c0_45 = arith.constant 0 : index
    %137 = vector.load %arg2[%c0_44, %c0_45] : memref<64x256xbf16, #tpu.memory_space<vmem>>, vector<64x256xbf16>
    %cst_46 = arith.constant dense<0.000000e+00> : vector<1x256xf32>
    %138 = tpu.matmul %136, %137, %cst_46 {dimension_numbers = #tpu.dot_dimension_numbers<[1], [0], [0], [1], [0, 0, 1, 1], [], []>} : vector<1x64xbf16>, vector<64x256xbf16>, vector<1x256xf32> -> vector<1x256xf32>
    %139 = arith.addf %135, %138 : vector<1x256xf32>
    %140 = math.tanh %139 : vector<1x256xf32>
    %141 = vector.extract_strided_slice %140 {offsets = [0, 0], sizes = [1, 192], strides = [1, 1]} : vector<1x256xf32> to vector<1x192xf32>
    %cst_47 = arith.constant 5.000000e-01 : f32
    %142 = vector.broadcast %cst_47 : f32 to vector<1x192xf32>
    %143 = arith.mulf %141, %142 : vector<1x192xf32>
    %cst_48 = arith.constant 5.000000e-01 : f32
    %144 = vector.broadcast %cst_48 : f32 to vector<1x192xf32>
    %145 = arith.addf %143, %144 : vector<1x192xf32>
    %146 = vector.extract_strided_slice %145 {offsets = [0, 0], sizes = [1, 64], strides = [1, 1]} : vector<1x192xf32> to vector<1x64xf32>
    %147 = vector.extract_strided_slice %145 {offsets = [0, 64], sizes = [1, 64], strides = [1, 1]} : vector<1x192xf32> to vector<1x64xf32>
    %148 = vector.extract_strided_slice %145 {offsets = [0, 128], sizes = [1, 64], strides = [1, 1]} : vector<1x192xf32> to vector<1x64xf32>
    %149 = vector.extract_strided_slice %140 {offsets = [0, 192], sizes = [1, 64], strides = [1, 1]} : vector<1x256xf32> to vector<1x64xf32>
    %150 = arith.mulf %147, %111 : vector<1x64xf32>
    %151 = arith.mulf %146, %149 : vector<1x64xf32>
    %152 = arith.addf %150, %151 : vector<1x64xf32>
    %153 = math.tanh %152 : vector<1x64xf32>
    %154 = arith.mulf %148, %153 : vector<1x64xf32>
    %155 = tpu.concatenate %154, %134 in 1 : vector<1x64xf32>, vector<1x32xf32> -> vector<1x96xf32>
    %156 = arith.truncf %155 : vector<1x96xf32> to vector<1x96xbf16>
    %c0_49 = arith.constant 0 : index
    %c0_50 = arith.constant 0 : index
    %157 = vector.load %arg4[%c0_49, %c0_50] : memref<96x128xbf16, #tpu.memory_space<vmem>>, vector<96x128xbf16>
    %cst_51 = arith.constant dense<0.000000e+00> : vector<1x128xf32>
    %158 = tpu.matmul %156, %157, %cst_51 {dimension_numbers = #tpu.dot_dimension_numbers<[1], [0], [0], [1], [0, 0, 1, 1], [], []>} : vector<1x96xbf16>, vector<96x128xbf16>, vector<1x128xf32> -> vector<1x128xf32>
    %c0_52 = arith.constant 0 : index
    %c0_53 = arith.constant 0 : index
    %159 = vector.load %arg5[%c0_52, %c0_53] : memref<1x128xf32, #tpu.memory_space<vmem>>, vector<1x128xf32>
    %160 = arith.addf %158, %159 : vector<1x128xf32>
    %161 = math.tanh %160 : vector<1x128xf32>
    %162 = vector.extract_strided_slice %161 {offsets = [0, 0], sizes = [1, 96], strides = [1, 1]} : vector<1x128xf32> to vector<1x96xf32>
    %cst_54 = arith.constant 5.000000e-01 : f32
    %163 = vector.broadcast %cst_54 : f32 to vector<1x96xf32>
    %164 = arith.mulf %162, %163 : vector<1x96xf32>
    %cst_55 = arith.constant 5.000000e-01 : f32
    %165 = vector.broadcast %cst_55 : f32 to vector<1x96xf32>
    %166 = arith.addf %164, %165 : vector<1x96xf32>
    %167 = vector.extract_strided_slice %166 {offsets = [0, 0], sizes = [1, 32], strides = [1, 1]} : vector<1x96xf32> to vector<1x32xf32>
    %168 = vector.extract_strided_slice %166 {offsets = [0, 32], sizes = [1, 32], strides = [1, 1]} : vector<1x96xf32> to vector<1x32xf32>
    %169 = vector.extract_strided_slice %166 {offsets = [0, 64], sizes = [1, 32], strides = [1, 1]} : vector<1x96xf32> to vector<1x32xf32>
    %170 = vector.extract_strided_slice %161 {offsets = [0, 96], sizes = [1, 32], strides = [1, 1]} : vector<1x128xf32> to vector<1x32xf32>
    %171 = arith.mulf %168, %132 : vector<1x32xf32>
    %172 = arith.mulf %167, %170 : vector<1x32xf32>
    %173 = arith.addf %171, %172 : vector<1x32xf32>
    %174 = math.tanh %173 : vector<1x32xf32>
    %175 = arith.mulf %169, %174 : vector<1x32xf32>
    %176 = vector.extract_strided_slice %11 {offsets = [4, 0], sizes = [1, 256], strides = [1, 1]} : vector<8x256xf32> to vector<1x256xf32>
    %177 = arith.truncf %154 : vector<1x64xf32> to vector<1x64xbf16>
    %c0_56 = arith.constant 0 : index
    %c0_57 = arith.constant 0 : index
    %178 = vector.load %arg2[%c0_56, %c0_57] : memref<64x256xbf16, #tpu.memory_space<vmem>>, vector<64x256xbf16>
    %cst_58 = arith.constant dense<0.000000e+00> : vector<1x256xf32>
    %179 = tpu.matmul %177, %178, %cst_58 {dimension_numbers = #tpu.dot_dimension_numbers<[1], [0], [0], [1], [0, 0, 1, 1], [], []>} : vector<1x64xbf16>, vector<64x256xbf16>, vector<1x256xf32> -> vector<1x256xf32>
    %180 = arith.addf %176, %179 : vector<1x256xf32>
    %181 = math.tanh %180 : vector<1x256xf32>
    %182 = vector.extract_strided_slice %181 {offsets = [0, 0], sizes = [1, 192], strides = [1, 1]} : vector<1x256xf32> to vector<1x192xf32>
    %cst_59 = arith.constant 5.000000e-01 : f32
    %183 = vector.broadcast %cst_59 : f32 to vector<1x192xf32>
    %184 = arith.mulf %182, %183 : vector<1x192xf32>
    %cst_60 = arith.constant 5.000000e-01 : f32
    %185 = vector.broadcast %cst_60 : f32 to vector<1x192xf32>
    %186 = arith.addf %184, %185 : vector<1x192xf32>
    %187 = vector.extract_strided_slice %186 {offsets = [0, 0], sizes = [1, 64], strides = [1, 1]} : vector<1x192xf32> to vector<1x64xf32>
    %188 = vector.extract_strided_slice %186 {offsets = [0, 64], sizes = [1, 64], strides = [1, 1]} : vector<1x192xf32> to vector<1x64xf32>
    %189 = vector.extract_strided_slice %186 {offsets = [0, 128], sizes = [1, 64], strides = [1, 1]} : vector<1x192xf32> to vector<1x64xf32>
    %190 = vector.extract_strided_slice %181 {offsets = [0, 192], sizes = [1, 64], strides = [1, 1]} : vector<1x256xf32> to vector<1x64xf32>
    %191 = arith.mulf %188, %152 : vector<1x64xf32>
    %192 = arith.mulf %187, %190 : vector<1x64xf32>
    %193 = arith.addf %191, %192 : vector<1x64xf32>
    %194 = math.tanh %193 : vector<1x64xf32>
    %195 = arith.mulf %189, %194 : vector<1x64xf32>
    %196 = tpu.concatenate %195, %175 in 1 : vector<1x64xf32>, vector<1x32xf32> -> vector<1x96xf32>
    %197 = arith.truncf %196 : vector<1x96xf32> to vector<1x96xbf16>
    %c0_61 = arith.constant 0 : index
    %c0_62 = arith.constant 0 : index
    %198 = vector.load %arg4[%c0_61, %c0_62] : memref<96x128xbf16, #tpu.memory_space<vmem>>, vector<96x128xbf16>
    %cst_63 = arith.constant dense<0.000000e+00> : vector<1x128xf32>
    %199 = tpu.matmul %197, %198, %cst_63 {dimension_numbers = #tpu.dot_dimension_numbers<[1], [0], [0], [1], [0, 0, 1, 1], [], []>} : vector<1x96xbf16>, vector<96x128xbf16>, vector<1x128xf32> -> vector<1x128xf32>
    %c0_64 = arith.constant 0 : index
    %c0_65 = arith.constant 0 : index
    %200 = vector.load %arg5[%c0_64, %c0_65] : memref<1x128xf32, #tpu.memory_space<vmem>>, vector<1x128xf32>
    %201 = arith.addf %199, %200 : vector<1x128xf32>
    %202 = math.tanh %201 : vector<1x128xf32>
    %203 = vector.extract_strided_slice %202 {offsets = [0, 0], sizes = [1, 96], strides = [1, 1]} : vector<1x128xf32> to vector<1x96xf32>
    %cst_66 = arith.constant 5.000000e-01 : f32
    %204 = vector.broadcast %cst_66 : f32 to vector<1x96xf32>
    %205 = arith.mulf %203, %204 : vector<1x96xf32>
    %cst_67 = arith.constant 5.000000e-01 : f32
    %206 = vector.broadcast %cst_67 : f32 to vector<1x96xf32>
    %207 = arith.addf %205, %206 : vector<1x96xf32>
    %208 = vector.extract_strided_slice %207 {offsets = [0, 0], sizes = [1, 32], strides = [1, 1]} : vector<1x96xf32> to vector<1x32xf32>
    %209 = vector.extract_strided_slice %207 {offsets = [0, 32], sizes = [1, 32], strides = [1, 1]} : vector<1x96xf32> to vector<1x32xf32>
    %210 = vector.extract_strided_slice %207 {offsets = [0, 64], sizes = [1, 32], strides = [1, 1]} : vector<1x96xf32> to vector<1x32xf32>
    %211 = vector.extract_strided_slice %202 {offsets = [0, 96], sizes = [1, 32], strides = [1, 1]} : vector<1x128xf32> to vector<1x32xf32>
    %212 = arith.mulf %209, %173 : vector<1x32xf32>
    %213 = arith.mulf %208, %211 : vector<1x32xf32>
    %214 = arith.addf %212, %213 : vector<1x32xf32>
    %215 = math.tanh %214 : vector<1x32xf32>
    %216 = arith.mulf %210, %215 : vector<1x32xf32>
    %217 = vector.extract_strided_slice %11 {offsets = [5, 0], sizes = [1, 256], strides = [1, 1]} : vector<8x256xf32> to vector<1x256xf32>
    %218 = arith.truncf %195 : vector<1x64xf32> to vector<1x64xbf16>
    %c0_68 = arith.constant 0 : index
    %c0_69 = arith.constant 0 : index
    %219 = vector.load %arg2[%c0_68, %c0_69] : memref<64x256xbf16, #tpu.memory_space<vmem>>, vector<64x256xbf16>
    %cst_70 = arith.constant dense<0.000000e+00> : vector<1x256xf32>
    %220 = tpu.matmul %218, %219, %cst_70 {dimension_numbers = #tpu.dot_dimension_numbers<[1], [0], [0], [1], [0, 0, 1, 1], [], []>} : vector<1x64xbf16>, vector<64x256xbf16>, vector<1x256xf32> -> vector<1x256xf32>
    %221 = arith.addf %217, %220 : vector<1x256xf32>
    %222 = math.tanh %221 : vector<1x256xf32>
    %223 = vector.extract_strided_slice %222 {offsets = [0, 0], sizes = [1, 192], strides = [1, 1]} : vector<1x256xf32> to vector<1x192xf32>
    %cst_71 = arith.constant 5.000000e-01 : f32
    %224 = vector.broadcast %cst_71 : f32 to vector<1x192xf32>
    %225 = arith.mulf %223, %224 : vector<1x192xf32>
    %cst_72 = arith.constant 5.000000e-01 : f32
    %226 = vector.broadcast %cst_72 : f32 to vector<1x192xf32>
    %227 = arith.addf %225, %226 : vector<1x192xf32>
    %228 = vector.extract_strided_slice %227 {offsets = [0, 0], sizes = [1, 64], strides = [1, 1]} : vector<1x192xf32> to vector<1x64xf32>
    %229 = vector.extract_strided_slice %227 {offsets = [0, 64], sizes = [1, 64], strides = [1, 1]} : vector<1x192xf32> to vector<1x64xf32>
    %230 = vector.extract_strided_slice %227 {offsets = [0, 128], sizes = [1, 64], strides = [1, 1]} : vector<1x192xf32> to vector<1x64xf32>
    %231 = vector.extract_strided_slice %222 {offsets = [0, 192], sizes = [1, 64], strides = [1, 1]} : vector<1x256xf32> to vector<1x64xf32>
    %232 = arith.mulf %229, %193 : vector<1x64xf32>
    %233 = arith.mulf %228, %231 : vector<1x64xf32>
    %234 = arith.addf %232, %233 : vector<1x64xf32>
    %235 = math.tanh %234 : vector<1x64xf32>
    %236 = arith.mulf %230, %235 : vector<1x64xf32>
    %237 = tpu.concatenate %236, %216 in 1 : vector<1x64xf32>, vector<1x32xf32> -> vector<1x96xf32>
    %238 = arith.truncf %237 : vector<1x96xf32> to vector<1x96xbf16>
    %c0_73 = arith.constant 0 : index
    %c0_74 = arith.constant 0 : index
    %239 = vector.load %arg4[%c0_73, %c0_74] : memref<96x128xbf16, #tpu.memory_space<vmem>>, vector<96x128xbf16>
    %cst_75 = arith.constant dense<0.000000e+00> : vector<1x128xf32>
    %240 = tpu.matmul %238, %239, %cst_75 {dimension_numbers = #tpu.dot_dimension_numbers<[1], [0], [0], [1], [0, 0, 1, 1], [], []>} : vector<1x96xbf16>, vector<96x128xbf16>, vector<1x128xf32> -> vector<1x128xf32>
    %c0_76 = arith.constant 0 : index
    %c0_77 = arith.constant 0 : index
    %241 = vector.load %arg5[%c0_76, %c0_77] : memref<1x128xf32, #tpu.memory_space<vmem>>, vector<1x128xf32>
    %242 = arith.addf %240, %241 : vector<1x128xf32>
    %243 = math.tanh %242 : vector<1x128xf32>
    %244 = vector.extract_strided_slice %243 {offsets = [0, 0], sizes = [1, 96], strides = [1, 1]} : vector<1x128xf32> to vector<1x96xf32>
    %cst_78 = arith.constant 5.000000e-01 : f32
    %245 = vector.broadcast %cst_78 : f32 to vector<1x96xf32>
    %246 = arith.mulf %244, %245 : vector<1x96xf32>
    %cst_79 = arith.constant 5.000000e-01 : f32
    %247 = vector.broadcast %cst_79 : f32 to vector<1x96xf32>
    %248 = arith.addf %246, %247 : vector<1x96xf32>
    %249 = vector.extract_strided_slice %248 {offsets = [0, 0], sizes = [1, 32], strides = [1, 1]} : vector<1x96xf32> to vector<1x32xf32>
    %250 = vector.extract_strided_slice %248 {offsets = [0, 32], sizes = [1, 32], strides = [1, 1]} : vector<1x96xf32> to vector<1x32xf32>
    %251 = vector.extract_strided_slice %248 {offsets = [0, 64], sizes = [1, 32], strides = [1, 1]} : vector<1x96xf32> to vector<1x32xf32>
    %252 = vector.extract_strided_slice %243 {offsets = [0, 96], sizes = [1, 32], strides = [1, 1]} : vector<1x128xf32> to vector<1x32xf32>
    %253 = arith.mulf %250, %214 : vector<1x32xf32>
    %254 = arith.mulf %249, %252 : vector<1x32xf32>
    %255 = arith.addf %253, %254 : vector<1x32xf32>
    %256 = math.tanh %255 : vector<1x32xf32>
    %257 = arith.mulf %251, %256 : vector<1x32xf32>
    %258 = vector.extract_strided_slice %11 {offsets = [6, 0], sizes = [1, 256], strides = [1, 1]} : vector<8x256xf32> to vector<1x256xf32>
    %259 = arith.truncf %236 : vector<1x64xf32> to vector<1x64xbf16>
    %c0_80 = arith.constant 0 : index
    %c0_81 = arith.constant 0 : index
    %260 = vector.load %arg2[%c0_80, %c0_81] : memref<64x256xbf16, #tpu.memory_space<vmem>>, vector<64x256xbf16>
    %cst_82 = arith.constant dense<0.000000e+00> : vector<1x256xf32>
    %261 = tpu.matmul %259, %260, %cst_82 {dimension_numbers = #tpu.dot_dimension_numbers<[1], [0], [0], [1], [0, 0, 1, 1], [], []>} : vector<1x64xbf16>, vector<64x256xbf16>, vector<1x256xf32> -> vector<1x256xf32>
    %262 = arith.addf %258, %261 : vector<1x256xf32>
    %263 = math.tanh %262 : vector<1x256xf32>
    %264 = vector.extract_strided_slice %263 {offsets = [0, 0], sizes = [1, 192], strides = [1, 1]} : vector<1x256xf32> to vector<1x192xf32>
    %cst_83 = arith.constant 5.000000e-01 : f32
    %265 = vector.broadcast %cst_83 : f32 to vector<1x192xf32>
    %266 = arith.mulf %264, %265 : vector<1x192xf32>
    %cst_84 = arith.constant 5.000000e-01 : f32
    %267 = vector.broadcast %cst_84 : f32 to vector<1x192xf32>
    %268 = arith.addf %266, %267 : vector<1x192xf32>
    %269 = vector.extract_strided_slice %268 {offsets = [0, 0], sizes = [1, 64], strides = [1, 1]} : vector<1x192xf32> to vector<1x64xf32>
    %270 = vector.extract_strided_slice %268 {offsets = [0, 64], sizes = [1, 64], strides = [1, 1]} : vector<1x192xf32> to vector<1x64xf32>
    %271 = vector.extract_strided_slice %268 {offsets = [0, 128], sizes = [1, 64], strides = [1, 1]} : vector<1x192xf32> to vector<1x64xf32>
    %272 = vector.extract_strided_slice %263 {offsets = [0, 192], sizes = [1, 64], strides = [1, 1]} : vector<1x256xf32> to vector<1x64xf32>
    %273 = arith.mulf %270, %234 : vector<1x64xf32>
    %274 = arith.mulf %269, %272 : vector<1x64xf32>
    %275 = arith.addf %273, %274 : vector<1x64xf32>
    %276 = math.tanh %275 : vector<1x64xf32>
    %277 = arith.mulf %271, %276 : vector<1x64xf32>
    %278 = tpu.concatenate %277, %257 in 1 : vector<1x64xf32>, vector<1x32xf32> -> vector<1x96xf32>
    %279 = arith.truncf %278 : vector<1x96xf32> to vector<1x96xbf16>
    %c0_85 = arith.constant 0 : index
    %c0_86 = arith.constant 0 : index
    %280 = vector.load %arg4[%c0_85, %c0_86] : memref<96x128xbf16, #tpu.memory_space<vmem>>, vector<96x128xbf16>
    %cst_87 = arith.constant dense<0.000000e+00> : vector<1x128xf32>
    %281 = tpu.matmul %279, %280, %cst_87 {dimension_numbers = #tpu.dot_dimension_numbers<[1], [0], [0], [1], [0, 0, 1, 1], [], []>} : vector<1x96xbf16>, vector<96x128xbf16>, vector<1x128xf32> -> vector<1x128xf32>
    %c0_88 = arith.constant 0 : index
    %c0_89 = arith.constant 0 : index
    %282 = vector.load %arg5[%c0_88, %c0_89] : memref<1x128xf32, #tpu.memory_space<vmem>>, vector<1x128xf32>
    %283 = arith.addf %281, %282 : vector<1x128xf32>
    %284 = math.tanh %283 : vector<1x128xf32>
    %285 = vector.extract_strided_slice %284 {offsets = [0, 0], sizes = [1, 96], strides = [1, 1]} : vector<1x128xf32> to vector<1x96xf32>
    %cst_90 = arith.constant 5.000000e-01 : f32
    %286 = vector.broadcast %cst_90 : f32 to vector<1x96xf32>
    %287 = arith.mulf %285, %286 : vector<1x96xf32>
    %cst_91 = arith.constant 5.000000e-01 : f32
    %288 = vector.broadcast %cst_91 : f32 to vector<1x96xf32>
    %289 = arith.addf %287, %288 : vector<1x96xf32>
    %290 = vector.extract_strided_slice %289 {offsets = [0, 0], sizes = [1, 32], strides = [1, 1]} : vector<1x96xf32> to vector<1x32xf32>
    %291 = vector.extract_strided_slice %289 {offsets = [0, 32], sizes = [1, 32], strides = [1, 1]} : vector<1x96xf32> to vector<1x32xf32>
    %292 = vector.extract_strided_slice %289 {offsets = [0, 64], sizes = [1, 32], strides = [1, 1]} : vector<1x96xf32> to vector<1x32xf32>
    %293 = vector.extract_strided_slice %284 {offsets = [0, 96], sizes = [1, 32], strides = [1, 1]} : vector<1x128xf32> to vector<1x32xf32>
    %294 = arith.mulf %291, %255 : vector<1x32xf32>
    %295 = arith.mulf %290, %293 : vector<1x32xf32>
    %296 = arith.addf %294, %295 : vector<1x32xf32>
    %297 = math.tanh %296 : vector<1x32xf32>
    %298 = arith.mulf %292, %297 : vector<1x32xf32>
    %299 = vector.extract_strided_slice %11 {offsets = [7, 0], sizes = [1, 256], strides = [1, 1]} : vector<8x256xf32> to vector<1x256xf32>
    %300 = arith.truncf %277 : vector<1x64xf32> to vector<1x64xbf16>
    %c0_92 = arith.constant 0 : index
    %c0_93 = arith.constant 0 : index
    %301 = vector.load %arg2[%c0_92, %c0_93] : memref<64x256xbf16, #tpu.memory_space<vmem>>, vector<64x256xbf16>
    %cst_94 = arith.constant dense<0.000000e+00> : vector<1x256xf32>
    %302 = tpu.matmul %300, %301, %cst_94 {dimension_numbers = #tpu.dot_dimension_numbers<[1], [0], [0], [1], [0, 0, 1, 1], [], []>} : vector<1x64xbf16>, vector<64x256xbf16>, vector<1x256xf32> -> vector<1x256xf32>
    %303 = arith.addf %299, %302 : vector<1x256xf32>
    %304 = math.tanh %303 : vector<1x256xf32>
    %305 = vector.extract_strided_slice %304 {offsets = [0, 0], sizes = [1, 192], strides = [1, 1]} : vector<1x256xf32> to vector<1x192xf32>
    %cst_95 = arith.constant 5.000000e-01 : f32
    %306 = vector.broadcast %cst_95 : f32 to vector<1x192xf32>
    %307 = arith.mulf %305, %306 : vector<1x192xf32>
    %cst_96 = arith.constant 5.000000e-01 : f32
    %308 = vector.broadcast %cst_96 : f32 to vector<1x192xf32>
    %309 = arith.addf %307, %308 : vector<1x192xf32>
    %310 = vector.extract_strided_slice %309 {offsets = [0, 0], sizes = [1, 64], strides = [1, 1]} : vector<1x192xf32> to vector<1x64xf32>
    %311 = vector.extract_strided_slice %309 {offsets = [0, 64], sizes = [1, 64], strides = [1, 1]} : vector<1x192xf32> to vector<1x64xf32>
    %312 = vector.extract_strided_slice %309 {offsets = [0, 128], sizes = [1, 64], strides = [1, 1]} : vector<1x192xf32> to vector<1x64xf32>
    %313 = vector.extract_strided_slice %304 {offsets = [0, 192], sizes = [1, 64], strides = [1, 1]} : vector<1x256xf32> to vector<1x64xf32>
    %314 = arith.mulf %311, %275 : vector<1x64xf32>
    %315 = arith.mulf %310, %313 : vector<1x64xf32>
    %316 = arith.addf %314, %315 : vector<1x64xf32>
    %317 = math.tanh %316 : vector<1x64xf32>
    %318 = arith.mulf %312, %317 : vector<1x64xf32>
    %319 = tpu.concatenate %318, %298 in 1 : vector<1x64xf32>, vector<1x32xf32> -> vector<1x96xf32>
    %320 = arith.truncf %319 : vector<1x96xf32> to vector<1x96xbf16>
    %c0_97 = arith.constant 0 : index
    %c0_98 = arith.constant 0 : index
    %321 = vector.load %arg4[%c0_97, %c0_98] : memref<96x128xbf16, #tpu.memory_space<vmem>>, vector<96x128xbf16>
    %cst_99 = arith.constant dense<0.000000e+00> : vector<1x128xf32>
    %322 = tpu.matmul %320, %321, %cst_99 {dimension_numbers = #tpu.dot_dimension_numbers<[1], [0], [0], [1], [0, 0, 1, 1], [], []>} : vector<1x96xbf16>, vector<96x128xbf16>, vector<1x128xf32> -> vector<1x128xf32>
    %c0_100 = arith.constant 0 : index
    %c0_101 = arith.constant 0 : index
    %323 = vector.load %arg5[%c0_100, %c0_101] : memref<1x128xf32, #tpu.memory_space<vmem>>, vector<1x128xf32>
    %324 = arith.addf %322, %323 : vector<1x128xf32>
    %325 = math.tanh %324 : vector<1x128xf32>
    %326 = vector.extract_strided_slice %325 {offsets = [0, 0], sizes = [1, 96], strides = [1, 1]} : vector<1x128xf32> to vector<1x96xf32>
    %cst_102 = arith.constant 5.000000e-01 : f32
    %327 = vector.broadcast %cst_102 : f32 to vector<1x96xf32>
    %328 = arith.mulf %326, %327 : vector<1x96xf32>
    %cst_103 = arith.constant 5.000000e-01 : f32
    %329 = vector.broadcast %cst_103 : f32 to vector<1x96xf32>
    %330 = arith.addf %328, %329 : vector<1x96xf32>
    %331 = vector.extract_strided_slice %330 {offsets = [0, 0], sizes = [1, 32], strides = [1, 1]} : vector<1x96xf32> to vector<1x32xf32>
    %332 = vector.extract_strided_slice %330 {offsets = [0, 32], sizes = [1, 32], strides = [1, 1]} : vector<1x96xf32> to vector<1x32xf32>
    %333 = vector.extract_strided_slice %330 {offsets = [0, 64], sizes = [1, 32], strides = [1, 1]} : vector<1x96xf32> to vector<1x32xf32>
    %334 = vector.extract_strided_slice %325 {offsets = [0, 96], sizes = [1, 32], strides = [1, 1]} : vector<1x128xf32> to vector<1x32xf32>
    %335 = arith.mulf %332, %296 : vector<1x32xf32>
    %336 = arith.mulf %331, %334 : vector<1x32xf32>
    %337 = arith.addf %335, %336 : vector<1x32xf32>
    %338 = math.tanh %337 : vector<1x32xf32>
    %339 = arith.mulf %333, %338 : vector<1x32xf32>
    %c0_104 = arith.constant 0 : index
    %c0_105 = arith.constant 0 : index
    %340 = vector.load %arg6[%c0_104, %c0_105] : memref<1x32xf32, #tpu.memory_space<vmem>>, vector<1x32xf32>
    tpu.vector_store %arg6[%c0_104, %c0_105], %339 {strides = array<i32>} : memref<1x32xf32, #tpu.memory_space<vmem>>, vector<1x32xf32>,
    return
  }
}

</mosaic_0001>

<llo_original>
// kernel: tpu_custom_call.1
$region0: #{tpu_custom_call.1}
  #allocation0 [shape = 'u32[]', space=smem, size = 0x4, offset = 0x4, fixed_abs, tag = 'smem constant byte address 0x4 - core index']
  #allocation1 [shape = 'u32[144,128]{1,0:T(1,128)}', space=vmem, size = 0x12000, scoped, tag = 'internal scratch']
  %s0 = inlined_call_operand.vmem [shape: f32[8,1], index: 0, kind: input, shape index: {}]
  %s1 = inlined_call_operand.vmem [shape: f32[1,256], index: 1, kind: input, shape index: {}]
  %s2 = inlined_call_operand.hbm [shape: bf16[64,256], index: 2, kind: input, shape index: {}]
  %s3 = inlined_call_operand.vmem [shape: f32[1,256], index: 3, kind: input, shape index: {}]
  %s4 = inlined_call_operand.hbm [shape: bf16[96,128], index: 4, kind: input, shape index: {}]
  %s5 = inlined_call_operand.vmem [shape: f32[1,128], index: 5, kind: input, shape index: {}]
  %s6 = inlined_call_operand.hbm [shape: f32[1,32], index: 6, kind: output, shape index: {}]
  %s7 = sld [smem:[#allocation0]]
  $region42: #{tpu_custom_call.1} parent=0
    _
  %s9 = ssub.s32 1, %s7
  %s10 = scalar_select 0, %s9, %s7
  $region1: #{tpu_custom_call.1} parent=0
    #allocation2 [shape = 'u8[32768]{0}', space=vmem, size = 0x8000, scoped, tag = 'input window, operand 2, single buffered']
    #allocation3 [shape = 's32[1]{0}', space=sflag, size = 0x4, scoped, tag = 'scoped memory for tpu_custom_call.1']
    #allocation4 [shape = 's32[1]{0}', space=sflag, size = 0x4, scoped, tag = 'scoped memory for tpu_custom_call.1']
    #allocation5 [shape = 'u8[24576]{0}', space=vmem, size = 0x6000, scoped, tag = 'input window, operand 4, single buffered']
    #allocation6 [shape = 's32[1]{0}', space=sflag, size = 0x4, scoped, tag = 'scoped memory for tpu_custom_call.1']
    #allocation7 [shape = 'u8[512]{0}', space=vmem, size = 0x400, scoped, tag = 'output window, operand 0, single buffered']
    %11 = vsyncpa [#allocation3], 0
    %12 = vsyncpa [#allocation6], 0
    %13 = vsyncpa [#allocation4], 0
    // Predicated region
    $region2: #{tpu_custom_call.1} parent=1 // pred_check
      _
    $region3: #{tpu_custom_call.1} parent=1 // pred_check_branch
      %15 = sbr.rel (0) target = $region5
    $region4: #{tpu_custom_call.1} parent=1 // pred_region
      _
    $region5: #{tpu_custom_call.1} parent=1 // pred_fallthru
      _
    // Predicated region
    $region6: #{tpu_custom_call.1} parent=1 // pred_check
      _
    $region7: #{tpu_custom_call.1} parent=1 // pred_check_branch
      %17 = sbr.rel (0) target = $region9
    $region8: #{tpu_custom_call.1} parent=1 // pred_region
      _
    $region9: #{tpu_custom_call.1} parent=1 // pred_fallthru
      _
    // Predicated region
    $region10: #{tpu_custom_call.1} parent=1 // pred_check
      _
    $region11: #{tpu_custom_call.1} parent=1 // pred_check_branch
      %19 = sbr.rel (0) target = $region13
    $region12: #{tpu_custom_call.1} parent=1 // pred_region
      %s21 = ssub.s32 1024, 1024
      %22 = vsyncadd [#allocation3], %s21
      %s23 = sshll.u32 [#allocation2], 4
      %s24 = int_to_ptr.vmem [resolvable:$true] %s23
      %29 = dma.hbm_to_vmem [thread:$0]  %s2, 1024, %s24, [#allocation3], 128, 128, 8
    $region13: #{tpu_custom_call.1} parent=1 // pred_fallthru
      _
    // Predicated region
    $region14: #{tpu_custom_call.1} parent=1 // pred_check
      _
    $region15: #{tpu_custom_call.1} parent=1 // pred_check_branch
      %31 = sbr.rel (0) target = $region17
    $region16: #{tpu_custom_call.1} parent=1 // pred_region
      _
    $region17: #{tpu_custom_call.1} parent=1 // pred_fallthru
      _
    // Predicated region
    $region18: #{tpu_custom_call.1} parent=1 // pred_check
      _
    $region19: #{tpu_custom_call.1} parent=1 // pred_check_branch
      %33 = sbr.rel (0) target = $region21
    $region20: #{tpu_custom_call.1} parent=1 // pred_region
      %s35 = ssub.s32 768, 768
      %36 = vsyncadd [#allocation6], %s35
      %s37 = sshll.u32 [#allocation5], 4
      %s38 = int_to_ptr.vmem [resolvable:$true] %s37
      %43 = dma.hbm_to_vmem [thread:$0]  %s4, 768, %s38, [#allocation6], 64, 64, 4
    $region21: #{tpu_custom_call.1} parent=1 // pred_fallthru
      _
    // Predicated region
    $region22: #{tpu_custom_call.1} parent=1 // pred_check
      _
    $region23: #{tpu_custom_call.1} parent=1 // pred_check_branch
      %45 = sbr.rel (0) target = $region25
    $region24: #{tpu_custom_call.1} parent=1 // pred_region
      _
    $region25: #{tpu_custom_call.1} parent=1 // pred_fallthru
      _
    // Predicated region
    $region26: #{tpu_custom_call.1} parent=1 // pred_check
      _
    $region27: #{tpu_custom_call.1} parent=1 // pred_check_branch
      %47 = sbr.rel (0) target = $region29
    $region28: #{tpu_custom_call.1} parent=1 // pred_region
      %48 = dma.done [#allocation3], 1024
    $region29: #{tpu_custom_call.1} parent=1 // pred_fallthru
      _
    // Predicated region
    $region30: #{tpu_custom_call.1} parent=1 // pred_check
      _
    $region31: #{tpu_custom_call.1} parent=1 // pred_check_branch
      %50 = sbr.rel (0) target = $region33
    $region32: #{tpu_custom_call.1} parent=1 // pred_region
      %51 = dma.done [#allocation6], 768
    $region33: #{tpu_custom_call.1} parent=1 // pred_fallthru
      _
    %v53 = vld [vmem:[%s0] sm:$0xff]
    %v54 = vld [vmem:[%s1] sm:$0x3]
    %56 = vset.pattern.permute.xlu0 0
    %57 = vperm.xlu0 %56, %v53
    %v58 = vpop.permute.xlu0 %57
    %v61 = vlaneseq
    %v62 = vshrl.u32 %v61, 7
    %v63 = vsub.s32 0, %v62
    %v64 = vrot.slane %v54, %v63
    %v65 = vlaneseq
    %v66 = vshrl.u32 %v65, 7
    %v67 = vsub.s32 1, %v66
    %v68 = vrot.slane %v54, %v67
    %v71 = vmul.f32 %v58, %v64
    %v72 = vmul.f32 %v58, %v68
    %v73 = vld [vmem:[%s3] sm:$0x3]
    %v75 = vlaneseq
    %v76 = vshrl.u32 %v75, 7
    %v77 = vsub.s32 0, %v76
    %v78 = vrot.slane %v73, %v77
    %v79 = vlaneseq
    %v80 = vshrl.u32 %v79, 7
    %v81 = vsub.s32 1, %v80
    %v82 = vrot.slane %v73, %v81
    %v85 = vadd.f32 %v71, %v78
    %v86 = vadd.f32 %v72, %v82
    %v87 = vld [vmem:[#allocation2] sm:$0xff]
    %v88 = vld [vmem:[#allocation2 + $0x8] sm:$0xff]
    %v89 = vld [vmem:[#allocation2 + $0x10] sm:$0xff]
    %v90 = vld [vmem:[#allocation2 + $0x18] sm:$0xff]
    %v91 = vld [vmem:[#allocation2 + $0x20] sm:$0xff]
    %v92 = vld [vmem:[#allocation2 + $0x28] sm:$0xff]
    %v93 = vld [vmem:[#allocation2 + $0x30] sm:$0xff]
    %v94 = vld [vmem:[#allocation2 + $0x38] sm:$0xff]
    %v103 = vunpack.c.l.b16 %v87
    %v104 = vunpack.c.h.b16 %v87
    %v105 = vunpack.c.l.b16 %v88
    %v106 = vunpack.c.h.b16 %v88
    %v107 = vunpack.c.l.b16 %v89
    %v108 = vunpack.c.h.b16 %v89
    %v109 = vunpack.c.l.b16 %v90
    %v110 = vunpack.c.h.b16 %v90
    %v111 = vunpack.c.l.b16 %v91
    %v112 = vunpack.c.h.b16 %v91
    %v113 = vunpack.c.l.b16 %v92
    %v114 = vunpack.c.h.b16 %v92
    %v115 = vunpack.c.l.b16 %v93
    %v116 = vunpack.c.h.b16 %v93
    %v117 = vunpack.c.l.b16 %v94
    %v118 = vunpack.c.h.b16 %v94
    %v119 = vpack.c.b16 %v105, %v103
    %v120 = vpack.c.b16 %v106, %v104
    %v121 = vpack.c.b16 %v109, %v107
    %v122 = vpack.c.b16 %v110, %v108
    %v123 = vpack.c.b16 %v113, %v111
    %v124 = vpack.c.b16 %v114, %v112
    %v125 = vpack.c.b16 %v117, %v115
    %v126 = vpack.c.b16 %v118, %v116
    %vm135 = vcmask 523264
    %v137 = vsel %vm135, 0, 0
    %139 = vmatprep.subr.bf16.mxu0 0
    %140 = vmatpush1.bf16.msra.mxu0 0
    %141 = vmatprep.subr.bf16.mxu0 0
    %142 = vmatpush1.bf16.msra.mxu0 0
    %143 = vmatprep.subr.bf16.mxu0 0
    %144 = vmatpush1.bf16.msra.mxu0 0
    %145 = vmatprep.subr.bf16.mxu0 0
    %146 = vmatpush1.bf16.msra.mxu0 0
    %147 = vmatprep.subr.bf16.mxu0 %v126
    %148 = vmatpush1.bf16.msra.mxu0 %v125
    %149 = vmatprep.subr.bf16.mxu0 %v124
    %150 = vmatpush1.bf16.msra.mxu0 %v123
    %151 = vmatprep.subr.bf16.mxu0 %v122
    %152 = vmatpush1.bf16.msra.mxu0 %v121
    %153 = vmatprep.subr.bf16.mxu0 %v120
    %154 = vmatpush1.bf16.msra.mxu0 %v119
    %155 = vmatprep.subr.bf16.mxu0 0
    %156 = vmatpush2.bf16.msra.mxu0 0
    %157 = vmatprep.subr.bf16.mxu0 0
    %158 = vmatpush2.bf16.msra.mxu0 0
    %159 = vmatprep.subr.bf16.mxu0 0
    %160 = vmatpush2.bf16.msra.mxu0 0
    %161 = vmatprep.subr.bf16.mxu0 0
    %162 = vmatpush2.bf16.msra.mxu0 0
    %163 = vmatprep.subr.bf16.mxu0 0
    %164 = vmatpush2.bf16.msra.mxu0 0
    %165 = vmatprep.subr.bf16.mxu0 0
    %166 = vmatpush2.bf16.msra.mxu0 0
    %167 = vmatprep.subr.bf16.mxu0 0
    %168 = vmatpush2.bf16.msra.mxu0 0
    %169 = vmatprep.subr.bf16.mxu0 0
    %170 = vmatpush2.bf16.msra.mxu0 0
    %171 = vmatprep.mubr.bf16.mxu0 0
    %172 = vmatmul.mubr.bf16.gmra.mxu0 %v137
    %v173 = vpop.f32.mrf.mxu0
    %v174 = vadd.f32 0.0, %v173
    %v175 = vpop.f32.mrf.mxu0
    %v176 = vadd.f32 0.0, %v175
    %v177 = vpop.f32.mrf.mxu0
    %v178 = vpop.f32.mrf.mxu0
    %179 = vdwg.mxu0
    %v180 = vadd.f32 %v85, %v174
    %v181 = vadd.f32 %v86, %v176
    %v182 = vtanh.pop %v180
    %v183 = vtanh.pop %v181
    %v184 = vmul.f32 %v182, 0.5
    %v185 = vmul.f32 %v183, 0.5
    %v186 = vadd.f32 %v184, 0.5
    %v187 = vadd.f32 %v185, 0.5
    %v188 = vmul.f32 %v186, 0.0
    %190 = vrot.lane.b32.xlu0 %v183, 64
    %v191 = vpop.permute.xlu0 %190
    %v193 = vmul.f32 %v186, %v191
    %195 = vrot.lane.b32.xlu0 %v193, 64
    %v196 = vpop.permute.xlu0 %195
    %v198 = vadd.f32 %v188, %v196
    %v199 = vtanh.pop %v198
    %201 = vrot.lane.b32.xlu0 %v199, 64
    %v202 = vpop.permute.xlu0 %201
    %v204 = vmul.f32 %v187, %v202
    %v205 = vsel %vm135, %v204, 0.0
    %v206 = vpack.c.bf16 %v205, %v205
    %v207 = vld [vmem:[#allocation5] sm:$0xf]
    %v208 = vld [vmem:[#allocation5 + $0x4] sm:$0xf]
    %v209 = vld [vmem:[#allocation5 + $0x8] sm:$0xf]
    %v210 = vld [vmem:[#allocation5 + $0xc] sm:$0xf]
    %v211 = vld [vmem:[#allocation5 + $0x10] sm:$0xf]
    %v212 = vld [vmem:[#allocation5 + $0x14] sm:$0xf]
    %v213 = vld [vmem:[#allocation5 + $0x18] sm:$0xf]
    %v214 = vld [vmem:[#allocation5 + $0x1c] sm:$0xf]
    %v215 = vld [vmem:[#allocation5 + $0x20] sm:$0xf]
    %v216 = vld [vmem:[#allocation5 + $0x24] sm:$0xf]
    %v217 = vld [vmem:[#allocation5 + $0x28] sm:$0xf]
    %v218 = vld [vmem:[#allocation5 + $0x2c] sm:$0xf]
    %v219 = vld [vmem:[%s5] sm:$0x1]
    %v232 = vunpack.c.l.b16 %v207
    %v233 = vunpack.c.l.b16 %v208
    %v234 = vunpack.c.l.b16 %v209
    %v235 = vunpack.c.l.b16 %v210
    %v236 = vunpack.c.l.b16 %v211
    %v237 = vunpack.c.l.b16 %v212
    %v238 = vunpack.c.l.b16 %v213
    %v239 = vunpack.c.l.b16 %v214
    %v240 = vunpack.c.l.b16 %v215
    %v241 = vunpack.c.l.b16 %v216
    %v242 = vunpack.c.l.b16 %v217
    %v243 = vunpack.c.l.b16 %v218
    %v244 = vpack.c.b16 %v233, %v232
    %v245 = vpack.c.b16 %v235, %v234
    %v246 = vpack.c.b16 %v237, %v236
    %v247 = vpack.c.b16 %v239, %v238
    %v248 = vpack.c.b16 %v241, %v240
    %v249 = vpack.c.b16 %v243, %v242
    %vm256 = vcmask 785408
    %v258 = vsel %vm256, %v206, 0
    %260 = vmatprep.subr.bf16.mxu0 0
    %261 = vmatpush1.bf16.msra.mxu0 0
    %262 = vmatprep.subr.bf16.mxu0 0
    %263 = vmatpush1.bf16.msra.mxu0 0
    %264 = vmatprep.subr.bf16.mxu0 0
    %265 = vmatpush1.bf16.msra.mxu0 %v249
    %266 = vmatprep.subr.bf16.mxu0 0
    %267 = vmatpush1.bf16.msra.mxu0 %v248
    %268 = vmatprep.subr.bf16.mxu0 0
    %269 = vmatpush1.bf16.msra.mxu0 %v247
    %270 = vmatprep.subr.bf16.mxu0 0
    %271 = vmatpush1.bf16.msra.mxu0 %v246
    %272 = vmatprep.subr.bf16.mxu0 0
    %273 = vmatpush1.bf16.msra.mxu0 %v245
    %274 = vmatprep.subr.bf16.mxu0 0
    %275 = vmatpush1.bf16.msra.mxu0 %v244
    %276 = vmatprep.subr.bf16.mxu0 0
    %277 = vmatpush2.bf16.msra.mxu0 0
    %278 = vmatprep.subr.bf16.mxu0 0
    %279 = vmatpush2.bf16.msra.mxu0 0
    %280 = vmatprep.subr.bf16.mxu0 0
    %281 = vmatpush2.bf16.msra.mxu0 0
    %282 = vmatprep.subr.bf16.mxu0 0
    %283 = vmatpush2.bf16.msra.mxu0 0
    %284 = vmatprep.subr.bf16.mxu0 0
    %285 = vmatpush2.bf16.msra.mxu0 0
    %286 = vmatprep.subr.bf16.mxu0 0
    %287 = vmatpush2.bf16.msra.mxu0 0
    %288 = vmatprep.subr.bf16.mxu0 0
    %289 = vmatpush2.bf16.msra.mxu0 0
    %290 = vmatprep.subr.bf16.mxu0 0
    %291 = vmatpush2.bf16.msra.mxu0 0
    %292 = vmatprep.mubr.bf16.mxu0 0
    %293 = vmatmul.mubr.bf16.gmra.mxu0 %v258
    %v294 = vpop.f32.mrf.mxu0
    %v295 = vadd.f32 %v219, %v294
    %v296 = vpop.f32.mrf.mxu0
    %v297 = vpop.f32.mrf.mxu0
    %v298 = vpop.f32.mrf.mxu0
    %299 = vdwg.mxu0
    %v300 = vtanh.pop %v295
    %v301 = vmul.f32 %v300, 0.5
    %v302 = vadd.f32 %v301, 0.5
    %v303 = vmul.f32 %v302, 0.0
    %305 = vrot.lane.b32.xlu0 %v300, 32
    %v306 = vpop.permute.xlu0 %305
    %v308 = vmul.f32 %v302, %v306
    %310 = vrot.lane.b32.xlu0 %v308, 32
    %v311 = vpop.permute.xlu0 %310
    %v313 = vadd.f32 %v303, %v311
    %v314 = vtanh.pop %v313
    %316 = vrot.lane.b32.xlu0 %v314, 32
    %v317 = vpop.permute.xlu0 %316
    %v319 = vmul.f32 %v302, %v317
    %v320 = vpack.c.bf16 %v204, %v204
    %v322 = vsel %vm135, %v320, 0
    %324 = vmatprep.subr.bf16.mxu0 0
    %325 = vmatpush1.bf16.msra.mxu0 0
    %326 = vmatprep.subr.bf16.mxu0 0
    %327 = vmatpush1.bf16.msra.mxu0 0
    %328 = vmatprep.subr.bf16.mxu0 0
    %329 = vmatpush1.bf16.msra.mxu0 0
    %330 = vmatprep.subr.bf16.mxu0 0
    %331 = vmatpush1.bf16.msra.mxu0 0
    %332 = vmatprep.subr.bf16.mxu0 %v126
    %333 = vmatpush1.bf16.msra.mxu0 %v125
    %334 = vmatprep.subr.bf16.mxu0 %v124
    %335 = vmatpush1.bf16.msra.mxu0 %v123
    %336 = vmatprep.subr.bf16.mxu0 %v122
    %337 = vmatpush1.bf16.msra.mxu0 %v121
    %338 = vmatprep.subr.bf16.mxu0 %v120
    %339 = vmatpush1.bf16.msra.mxu0 %v119
    %340 = vmatprep.subr.bf16.mxu0 0
    %341 = vmatpush2.bf16.msra.mxu0 0
    %342 = vmatprep.subr.bf16.mxu0 0
    %343 = vmatpush2.bf16.msra.mxu0 0
    %344 = vmatprep.subr.bf16.mxu0 0
    %345 = vmatpush2.bf16.msra.mxu0 0
    %346 = vmatprep.subr.bf16.mxu0 0
    %347 = vmatpush2.bf16.msra.mxu0 0
    %348 = vmatprep.subr.bf16.mxu0 0
    %349 = vmatpush2.bf16.msra.mxu0 0
    %350 = vmatprep.subr.bf16.mxu0 0
    %351 = vmatpush2.bf16.msra.mxu0 0
    %352 = vmatprep.subr.bf16.mxu0 0
    %353 = vmatpush2.bf16.msra.mxu0 0
    %354 = vmatprep.subr.bf16.mxu0 0
    %355 = vmatpush2.bf16.msra.mxu0 0
    %356 = vmatprep.mubr.bf16.mxu0 0
    %357 = vmatmul.mubr.bf16.gmra.mxu0 %v322
    %v358 = vpop.f32.mrf.mxu0
    %v359 = vadd.f32 0.0, %v358
    %v360 = vpop.f32.mrf.mxu0
    %v361 = vadd.f32 0.0, %v360
    %v362 = vpop.f32.mrf.mxu0
    %v363 = vpop.f32.mrf.mxu0
    %364 = vdwg.mxu0
    %v367 = vrot.slane %v359, 7
    %v368 = vrot.slane %v361, 7
    %v371 = vadd.f32 %v85, %v367
    %v372 = vadd.f32 %v86, %v368
    %v373 = vtanh.pop %v371
    %v374 = vtanh.pop %v372
    %v375 = vmul.f32 %v373, 0.5
    %v376 = vmul.f32 %v374, 0.5
    %v377 = vadd.f32 %v375, 0.5
    %v378 = vadd.f32 %v376, 0.5
    %v380 = vrot.slane %v198, 7
    %v382 = vmul.f32 %v377, %v380
    %384 = vrot.lane.b32.xlu0 %v374, 64
    %v385 = vpop.permute.xlu0 %384
    %v387 = vmul.f32 %v377, %v385
    %389 = vrot.lane.b32.xlu0 %v387, 64
    %v390 = vpop.permute.xlu0 %389
    %v392 = vadd.f32 %v382, %v390
    %v393 = vtanh.pop %v392
    %395 = vrot.lane.b32.xlu0 %v393, 64
    %v396 = vpop.permute.xlu0 %395
    %v398 = vmul.f32 %v378, %v396
    %v400 = vrot.slane %v319, 7
    %v402 = vsel %vm135, %v398, %v400
    %v403 = vpack.c.bf16 %v402, %v402
    %v405 = vshrl.u32 %v403, 16
    %v408 = vsel %vm256, %v405, 0
    %410 = vmatprep.subr.bf16.mxu0 0
    %411 = vmatpush1.bf16.msra.mxu0 0
    %412 = vmatprep.subr.bf16.mxu0 0
    %413 = vmatpush1.bf16.msra.mxu0 0
    %414 = vmatprep.subr.bf16.mxu0 0
    %415 = vmatpush1.bf16.msra.mxu0 %v249
    %416 = vmatprep.subr.bf16.mxu0 0
    %417 = vmatpush1.bf16.msra.mxu0 %v248
    %418 = vmatprep.subr.bf16.mxu0 0
    %419 = vmatpush1.bf16.msra.mxu0 %v247
    %420 = vmatprep.subr.bf16.mxu0 0
    %421 = vmatpush1.bf16.msra.mxu0 %v246
    %422 = vmatprep.subr.bf16.mxu0 0
    %423 = vmatpush1.bf16.msra.mxu0 %v245
    %424 = vmatprep.subr.bf16.mxu0 0
    %425 = vmatpush1.bf16.msra.mxu0 %v244
    %426 = vmatprep.subr.bf16.mxu0 0
    %427 = vmatpush2.bf16.msra.mxu0 0
    %428 = vmatprep.subr.bf16.mxu0 0
    %429 = vmatpush2.bf16.msra.mxu0 0
    %430 = vmatprep.subr.bf16.mxu0 0
    %431 = vmatpush2.bf16.msra.mxu0 0
    %432 = vmatprep.subr.bf16.mxu0 0
    %433 = vmatpush2.bf16.msra.mxu0 0
    %434 = vmatprep.subr.bf16.mxu0 0
    %435 = vmatpush2.bf16.msra.mxu0 0
    %436 = vmatprep.subr.bf16.mxu0 0
    %437 = vmatpush2.bf16.msra.mxu0 0
    %438 = vmatprep.subr.bf16.mxu0 0
    %439 = vmatpush2.bf16.msra.mxu0 0
    %440 = vmatprep.subr.bf16.mxu0 0
    %441 = vmatpush2.bf16.msra.mxu0 0
    %442 = vmatprep.mubr.bf16.mxu0 0
    %443 = vmatmul.mubr.bf16.gmra.mxu0 %v408
    %v444 = vpop.f32.mrf.mxu0
    %v445 = vadd.f32 %v219, %v444
    %v446 = vpop.f32.mrf.mxu0
    %v447 = vpop.f32.mrf.mxu0
    %v448 = vpop.f32.mrf.mxu0
    %449 = vdwg.mxu0
    %v450 = vtanh.pop %v445
    %v451 = vmul.f32 %v450, 0.5
    %v452 = vadd.f32 %v451, 0.5
    %v453 = vmul.f32 %v452, %v313
    %455 = vrot.lane.b32.xlu0 %v450, 32
    %v456 = vpop.permute.xlu0 %455
    %v458 = vmul.f32 %v452, %v456
    %460 = vrot.lane.b32.xlu0 %v458, 32
    %v461 = vpop.permute.xlu0 %460
    %v463 = vadd.f32 %v453, %v461
    %v464 = vtanh.pop %v463
    %466 = vrot.lane.b32.xlu0 %v464, 32
    %v467 = vpop.permute.xlu0 %466
    %v469 = vmul.f32 %v452, %v467
    %v470 = vpack.c.bf16 %v398, %v398
    %v472 = vshrl.u32 %v470, 16
    %v475 = vsel %vm135, %v472, 0
    %477 = vmatprep.subr.bf16.mxu0 0
    %478 = vmatpush1.bf16.msra.mxu0 0
    %479 = vmatprep.subr.bf16.mxu0 0
    %480 = vmatpush1.bf16.msra.mxu0 0
    %481 = vmatprep.subr.bf16.mxu0 0
    %482 = vmatpush1.bf16.msra.mxu0 0
    %483 = vmatprep.subr.bf16.mxu0 0
    %484 = vmatpush1.bf16.msra.mxu0 0
    %485 = vmatprep.subr.bf16.mxu0 %v126
    %486 = vmatpush1.bf16.msra.mxu0 %v125
    %487 = vmatprep.subr.bf16.mxu0 %v124
    %488 = vmatpush1.bf16.msra.mxu0 %v123
    %489 = vmatprep.subr.bf16.mxu0 %v122
    %490 = vmatpush1.bf16.msra.mxu0 %v121
    %491 = vmatprep.subr.bf16.mxu0 %v120
    %492 = vmatpush1.bf16.msra.mxu0 %v119
    %493 = vmatprep.subr.bf16.mxu0 0
    %494 = vmatpush2.bf16.msra.mxu0 0
    %495 = vmatprep.subr.bf16.mxu0 0
    %496 = vmatpush2.bf16.msra.mxu0 0
    %497 = vmatprep.subr.bf16.mxu0 0
    %498 = vmatpush2.bf16.msra.mxu0 0
    %499 = vmatprep.subr.bf16.mxu0 0
    %500 = vmatpush2.bf16.msra.mxu0 0
    %501 = vmatprep.subr.bf16.mxu0 0
    %502 = vmatpush2.bf16.msra.mxu0 0
    %503 = vmatprep.subr.bf16.mxu0 0
    %504 = vmatpush2.bf16.msra.mxu0 0
    %505 = vmatprep.subr.bf16.mxu0 0
    %506 = vmatpush2.bf16.msra.mxu0 0
    %507 = vmatprep.subr.bf16.mxu0 0
    %508 = vmatpush2.bf16.msra.mxu0 0
    %509 = vmatprep.mubr.bf16.mxu0 0
    %510 = vmatmul.mubr.bf16.gmra.mxu0 %v475
    %v511 = vpop.f32.mrf.mxu0
    %v512 = vadd.f32 0.0, %v511
    %v513 = vpop.f32.mrf.mxu0
    %v514 = vadd.f32 0.0, %v513
    %v515 = vpop.f32.mrf.mxu0
    %v516 = vpop.f32.mrf.mxu0
    %517 = vdwg.mxu0
    %v520 = vrot.slane %v512, 6
    %v521 = vrot.slane %v514, 6
    %v524 = vadd.f32 %v85, %v520
    %v525 = vadd.f32 %v86, %v521
    %v526 = vtanh.pop %v524
    %v527 = vtanh.pop %v525
    %v528 = vmul.f32 %v526, 0.5
    %v529 = vmul.f32 %v527, 0.5
    %v530 = vadd.f32 %v528, 0.5
    %v531 = vadd.f32 %v529, 0.5
    %v533 = vrot.slane %v392, 7
    %v535 = vmul.f32 %v530, %v533
    %537 = vrot.lane.b32.xlu0 %v527, 64
    %v538 = vpop.permute.xlu0 %537
    %v540 = vmul.f32 %v530, %v538
    %542 = vrot.lane.b32.xlu0 %v540, 64
    %v543 = vpop.permute.xlu0 %542
    %v545 = vadd.f32 %v535, %v543
    %v546 = vtanh.pop %v545
    %548 = vrot.lane.b32.xlu0 %v546, 64
    %v549 = vpop.permute.xlu0 %548
    %v551 = vmul.f32 %v531, %v549
    %v553 = vrot.slane %v469, 6
    %v555 = vsel %vm135, %v551, %v553
    %v556 = vpack.c.bf16 %v555, %v555
    %v558 = vrot.slane %v556, 1
    %v560 = vsel %vm256, %v558, 0
    %562 = vmatprep.subr.bf16.mxu0 0
    %563 = vmatpush1.bf16.msra.mxu0 0
    %564 = vmatprep.subr.bf16.mxu0 0
    %565 = vmatpush1.bf16.msra.mxu0 0
    %566 = vmatprep.subr.bf16.mxu0 0
    %567 = vmatpush1.bf16.msra.mxu0 %v249
    %568 = vmatprep.subr.bf16.mxu0 0
    %569 = vmatpush1.bf16.msra.mxu0 %v248
    %570 = vmatprep.subr.bf16.mxu0 0
    %571 = vmatpush1.bf16.msra.mxu0 %v247
    %572 = vmatprep.subr.bf16.mxu0 0
    %573 = vmatpush1.bf16.msra.mxu0 %v246
    %574 = vmatprep.subr.bf16.mxu0 0
    %575 = vmatpush1.bf16.msra.mxu0 %v245
    %576 = vmatprep.subr.bf16.mxu0 0
    %577 = vmatpush1.bf16.msra.mxu0 %v244
    %578 = vmatprep.subr.bf16.mxu0 0
    %579 = vmatpush2.bf16.msra.mxu0 0
    %580 = vmatprep.subr.bf16.mxu0 0
    %581 = vmatpush2.bf16.msra.mxu0 0
    %582 = vmatprep.subr.bf16.mxu0 0
    %583 = vmatpush2.bf16.msra.mxu0 0
    %584 = vmatprep.subr.bf16.mxu0 0
    %585 = vmatpush2.bf16.msra.mxu0 0
    %586 = vmatprep.subr.bf16.mxu0 0
    %587 = vmatpush2.bf16.msra.mxu0 0
    %588 = vmatprep.subr.bf16.mxu0 0
    %589 = vmatpush2.bf16.msra.mxu0 0
    %590 = vmatprep.subr.bf16.mxu0 0
    %591 = vmatpush2.bf16.msra.mxu0 0
    %592 = vmatprep.subr.bf16.mxu0 0
    %593 = vmatpush2.bf16.msra.mxu0 0
    %594 = vmatprep.mubr.bf16.mxu0 0
    %595 = vmatmul.mubr.bf16.gmra.mxu0 %v560
    %v596 = vpop.f32.mrf.mxu0
    %v597 = vadd.f32 %v219, %v596
    %v598 = vpop.f32.mrf.mxu0
    %v599 = vpop.f32.mrf.mxu0
    %v600 = vpop.f32.mrf.mxu0
    %601 = vdwg.mxu0
    %v602 = vtanh.pop %v597
    %v603 = vmul.f32 %v602, 0.5
    %v604 = vadd.f32 %v603, 0.5
    %v605 = vmul.f32 %v604, %v463
    %607 = vrot.lane.b32.xlu0 %v602, 32
    %v608 = vpop.permute.xlu0 %607
    %v610 = vmul.f32 %v604, %v608
    %612 = vrot.lane.b32.xlu0 %v610, 32
    %v613 = vpop.permute.xlu0 %612
    %v615 = vadd.f32 %v605, %v613
    %v616 = vtanh.pop %v615
    %618 = vrot.lane.b32.xlu0 %v616, 32
    %v619 = vpop.permute.xlu0 %618
    %v621 = vmul.f32 %v604, %v619
    %v622 = vpack.c.bf16 %v551, %v551
    %v624 = vrot.slane %v622, 1
    %v626 = vsel %vm135, %v624, 0
    %628 = vmatprep.subr.bf16.mxu0 0
    %629 = vmatpush1.bf16.msra.mxu0 0
    %630 = vmatprep.subr.bf16.mxu0 0
    %631 = vmatpush1.bf16.msra.mxu0 0
    %632 = vmatprep.subr.bf16.mxu0 0
    %633 = vmatpush1.bf16.msra.mxu0 0
    %634 = vmatprep.subr.bf16.mxu0 0
    %635 = vmatpush1.bf16.msra.mxu0 0
    %636 = vmatprep.subr.bf16.mxu0 %v126
    %637 = vmatpush1.bf16.msra.mxu0 %v125
    %638 = vmatprep.subr.bf16.mxu0 %v124
    %639 = vmatpush1.bf16.msra.mxu0 %v123
    %640 = vmatprep.subr.bf16.mxu0 %v122
    %641 = vmatpush1.bf16.msra.mxu0 %v121
    %642 = vmatprep.subr.bf16.mxu0 %v120
    %643 = vmatpush1.bf16.msra.mxu0 %v119
    %644 = vmatprep.subr.bf16.mxu0 0
    %645 = vmatpush2.bf16.msra.mxu0 0
    %646 = vmatprep.subr.bf16.mxu0 0
    %647 = vmatpush2.bf16.msra.mxu0 0
    %648 = vmatprep.subr.bf16.mxu0 0
    %649 = vmatpush2.bf16.msra.mxu0 0
    %650 = vmatprep.subr.bf16.mxu0 0
    %651 = vmatpush2.bf16.msra.mxu0 0
    %652 = vmatprep.subr.bf16.mxu0 0
    %653 = vmatpush2.bf16.msra.mxu0 0
    %654 = vmatprep.subr.bf16.mxu0 0
    %655 = vmatpush2.bf16.msra.mxu0 0
    %656 = vmatprep.subr.bf16.mxu0 0
    %657 = vmatpush2.bf16.msra.mxu0 0
    %658 = vmatprep.subr.bf16.mxu0 0
    %659 = vmatpush2.bf16.msra.mxu0 0
    %660 = vmatprep.mubr.bf16.mxu0 0
    %661 = vmatmul.mubr.bf16.gmra.mxu0 %v626
    %v662 = vpop.f32.mrf.mxu0
    %v663 = vadd.f32 0.0, %v662
    %v664 = vpop.f32.mrf.mxu0
    %v665 = vadd.f32 0.0, %v664
    %v666 = vpop.f32.mrf.mxu0
    %v667 = vpop.f32.mrf.mxu0
    %668 = vdwg.mxu0
    %v671 = vrot.slane %v663, 5
    %v672 = vrot.slane %v665, 5
    %v675 = vadd.f32 %v85, %v671
    %v676 = vadd.f32 %v86, %v672
    %v677 = vtanh.pop %v675
    %v678 = vtanh.pop %v676
    %v679 = vmul.f32 %v677, 0.5
    %v680 = vmul.f32 %v678, 0.5
    %v681 = vadd.f32 %v679, 0.5
    %v682 = vadd.f32 %v680, 0.5
    %v684 = vrot.slane %v545, 7
    %v686 = vmul.f32 %v681, %v684
    %688 = vrot.lane.b32.xlu0 %v678, 64
    %v689 = vpop.permute.xlu0 %688
    %v691 = vmul.f32 %v681, %v689
    %693 = vrot.lane.b32.xlu0 %v691, 64
    %v694 = vpop.permute.xlu0 %693
    %v696 = vadd.f32 %v686, %v694
    %v697 = vtanh.pop %v696
    %699 = vrot.lane.b32.xlu0 %v697, 64
    %v700 = vpop.permute.xlu0 %699
    %v702 = vmul.f32 %v682, %v700
    %v704 = vrot.slane %v621, 5
    %v706 = vsel %vm135, %v702, %v704
    %v707 = vpack.c.bf16 %v706, %v706
    %v709 = vshrl.u32 %v707, 16
    %v711 = vrot.slane %v709, 1
    %v713 = vsel %vm256, %v711, 0
    %715 = vmatprep.subr.bf16.mxu0 0
    %716 = vmatpush1.bf16.msra.mxu0 0
    %717 = vmatprep.subr.bf16.mxu0 0
    %718 = vmatpush1.bf16.msra.mxu0 0
    %719 = vmatprep.subr.bf16.mxu0 0
    %720 = vmatpush1.bf16.msra.mxu0 %v249
    %721 = vmatprep.subr.bf16.mxu0 0
    %722 = vmatpush1.bf16.msra.mxu0 %v248
    %723 = vmatprep.subr.bf16.mxu0 0
    %724 = vmatpush1.bf16.msra.mxu0 %v247
    %725 = vmatprep.subr.bf16.mxu0 0
    %726 = vmatpush1.bf16.msra.mxu0 %v246
    %727 = vmatprep.subr.bf16.mxu0 0
    %728 = vmatpush1.bf16.msra.mxu0 %v245
    %729 = vmatprep.subr.bf16.mxu0 0
    %730 = vmatpush1.bf16.msra.mxu0 %v244
    %731 = vmatprep.subr.bf16.mxu0 0
    %732 = vmatpush2.bf16.msra.mxu0 0
    %733 = vmatprep.subr.bf16.mxu0 0
    %734 = vmatpush2.bf16.msra.mxu0 0
    %735 = vmatprep.subr.bf16.mxu0 0
    %736 = vmatpush2.bf16.msra.mxu0 0
    %737 = vmatprep.subr.bf16.mxu0 0
    %738 = vmatpush2.bf16.msra.mxu0 0
    %739 = vmatprep.subr.bf16.mxu0 0
    %740 = vmatpush2.bf16.msra.mxu0 0
    %741 = vmatprep.subr.bf16.mxu0 0
    %742 = vmatpush2.bf16.msra.mxu0 0
    %743 = vmatprep.subr.bf16.mxu0 0
    %744 = vmatpush2.bf16.msra.mxu0 0
    %745 = vmatprep.subr.bf16.mxu0 0
    %746 = vmatpush2.bf16.msra.mxu0 0
    %747 = vmatprep.mubr.bf16.mxu0 0
    %748 = vmatmul.mubr.bf16.gmra.mxu0 %v713
    %v749 = vpop.f32.mrf.mxu0
    %v750 = vadd.f32 %v219, %v749
    %v751 = vpop.f32.mrf.mxu0
    %v752 = vpop.f32.mrf.mxu0
    %v753 = vpop.f32.mrf.mxu0
    %754 = vdwg.mxu0
    %v755 = vtanh.pop %v750
    %v756 = vmul.f32 %v755, 0.5
    %v757 = vadd.f32 %v756, 0.5
    %v758 = vmul.f32 %v757, %v615
    %760 = vrot.lane.b32.xlu0 %v755, 32
    %v761 = vpop.permute.xlu0 %760
    %v763 = vmul.f32 %v757, %v761
    %765 = vrot.lane.b32.xlu0 %v763, 32
    %v766 = vpop.permute.xlu0 %765
    %v768 = vadd.f32 %v758, %v766
    %v769 = vtanh.pop %v768
    %771 = vrot.lane.b32.xlu0 %v769, 32
    %v772 = vpop.permute.xlu0 %771
    %v774 = vmul.f32 %v757, %v772
    %v775 = vpack.c.bf16 %v702, %v702
    %v777 = vshrl.u32 %v775, 16
    %v779 = vrot.slane %v777, 1
    %v781 = vsel %vm135, %v779, 0
    %783 = vmatprep.subr.bf16.mxu0 0
    %784 = vmatpush1.bf16.msra.mxu0 0
    %785 = vmatprep.subr.bf16.mxu0 0
    %786 = vmatpush1.bf16.msra.mxu0 0
    %787 = vmatprep.subr.bf16.mxu0 0
    %788 = vmatpush1.bf16.msra.mxu0 0
    %789 = vmatprep.subr.bf16.mxu0 0
    %790 = vmatpush1.bf16.msra.mxu0 0
    %791 = vmatprep.subr.bf16.mxu0 %v126
    %792 = vmatpush1.bf16.msra.mxu0 %v125
    %793 = vmatprep.subr.bf16.mxu0 %v124
    %794 = vmatpush1.bf16.msra.mxu0 %v123
    %795 = vmatprep.subr.bf16.mxu0 %v122
    %796 = vmatpush1.bf16.msra.mxu0 %v121
    %797 = vmatprep.subr.bf16.mxu0 %v120
    %798 = vmatpush1.bf16.msra.mxu0 %v119
    %799 = vmatprep.subr.bf16.mxu0 0
    %800 = vmatpush2.bf16.msra.mxu0 0
    %801 = vmatprep.subr.bf16.mxu0 0
    %802 = vmatpush2.bf16.msra.mxu0 0
    %803 = vmatprep.subr.bf16.mxu0 0
    %804 = vmatpush2.bf16.msra.mxu0 0
    %805 = vmatprep.subr.bf16.mxu0 0
    %806 = vmatpush2.bf16.msra.mxu0 0
    %807 = vmatprep.subr.bf16.mxu0 0
    %808 = vmatpush2.bf16.msra.mxu0 0
    %809 = vmatprep.subr.bf16.mxu0 0
    %810 = vmatpush2.bf16.msra.mxu0 0
    %811 = vmatprep.subr.bf16.mxu0 0
    %812 = vmatpush2.bf16.msra.mxu0 0
    %813 = vmatprep.subr.bf16.mxu0 0
    %814 = vmatpush2.bf16.msra.mxu0 0
    %815 = vmatprep.mubr.bf16.mxu0 0
    %816 = vmatmul.mubr.bf16.gmra.mxu0 %v781
    %v817 = vpop.f32.mrf.mxu0
    %v818 = vadd.f32 0.0, %v817
    %v819 = vpop.f32.mrf.mxu0
    %v820 = vadd.f32 0.0, %v819
    %v821 = vpop.f32.mrf.mxu0
    %v822 = vpop.f32.mrf.mxu0
    %823 = vdwg.mxu0
    %v826 = vrot.slane %v818, 4
    %v827 = vrot.slane %v820, 4
    %v830 = vadd.f32 %v85, %v826
    %v831 = vadd.f32 %v86, %v827
    %v832 = vtanh.pop %v830
    %v833 = vtanh.pop %v831
    %v834 = vmul.f32 %v832, 0.5
    %v835 = vmul.f32 %v833, 0.5
    %v836 = vadd.f32 %v834, 0.5
    %v837 = vadd.f32 %v835, 0.5
    %v839 = vrot.slane %v696, 7
    %v841 = vmul.f32 %v836, %v839
    %843 = vrot.lane.b32.xlu0 %v833, 64
    %v844 = vpop.permute.xlu0 %843
    %v846 = vmul.f32 %v836, %v844
    %848 = vrot.lane.b32.xlu0 %v846, 64
    %v849 = vpop.permute.xlu0 %848
    %v851 = vadd.f32 %v841, %v849
    %v852 = vtanh.pop %v851
    %854 = vrot.lane.b32.xlu0 %v852, 64
    %v855 = vpop.permute.xlu0 %854
    %v857 = vmul.f32 %v837, %v855
    %v859 = vrot.slane %v774, 4
    %v861 = vsel %vm135, %v857, %v859
    %v862 = vpack.c.bf16 %v861, %v861
    %v864 = vrot.slane %v862, 2
    %v866 = vsel %vm256, %v864, 0
    %868 = vmatprep.subr.bf16.mxu0 0
    %869 = vmatpush1.bf16.msra.mxu0 0
    %870 = vmatprep.subr.bf16.mxu0 0
    %871 = vmatpush1.bf16.msra.mxu0 0
    %872 = vmatprep.subr.bf16.mxu0 0
    %873 = vmatpush1.bf16.msra.mxu0 %v249
    %874 = vmatprep.subr.bf16.mxu0 0
    %875 = vmatpush1.bf16.msra.mxu0 %v248
    %876 = vmatprep.subr.bf16.mxu0 0
    %877 = vmatpush1.bf16.msra.mxu0 %v247
    %878 = vmatprep.subr.bf16.mxu0 0
    %879 = vmatpush1.bf16.msra.mxu0 %v246
    %880 = vmatprep.subr.bf16.mxu0 0
    %881 = vmatpush1.bf16.msra.mxu0 %v245
    %882 = vmatprep.subr.bf16.mxu0 0
    %883 = vmatpush1.bf16.msra.mxu0 %v244
    %884 = vmatprep.subr.bf16.mxu0 0
    %885 = vmatpush2.bf16.msra.mxu0 0
    %886 = vmatprep.subr.bf16.mxu0 0
    %887 = vmatpush2.bf16.msra.mxu0 0
    %888 = vmatprep.subr.bf16.mxu0 0
    %889 = vmatpush2.bf16.msra.mxu0 0
    %890 = vmatprep.subr.bf16.mxu0 0
    %891 = vmatpush2.bf16.msra.mxu0 0
    %892 = vmatprep.subr.bf16.mxu0 0
    %893 = vmatpush2.bf16.msra.mxu0 0
    %894 = vmatprep.subr.bf16.mxu0 0
    %895 = vmatpush2.bf16.msra.mxu0 0
    %896 = vmatprep.subr.bf16.mxu0 0
    %897 = vmatpush2.bf16.msra.mxu0 0
    %898 = vmatprep.subr.bf16.mxu0 0
    %899 = vmatpush2.bf16.msra.mxu0 0
    %900 = vmatprep.mubr.bf16.mxu0 0
    %901 = vmatmul.mubr.bf16.gmra.mxu0 %v866
    %v902 = vpop.f32.mrf.mxu0
    %v903 = vadd.f32 %v219, %v902
    %v904 = vpop.f32.mrf.mxu0
    %v905 = vpop.f32.mrf.mxu0
    %v906 = vpop.f32.mrf.mxu0
    %907 = vdwg.mxu0
    %v908 = vtanh.pop %v903
    %v909 = vmul.f32 %v908, 0.5
    %v910 = vadd.f32 %v909, 0.5
    %v911 = vmul.f32 %v910, %v768
    %913 = vrot.lane.b32.xlu0 %v908, 32
    %v914 = vpop.permute.xlu0 %913
    %v916 = vmul.f32 %v910, %v914
    %918 = vrot.lane.b32.xlu0 %v916, 32
    %v919 = vpop.permute.xlu0 %918
    %v921 = vadd.f32 %v911, %v919
    %v922 = vtanh.pop %v921
    %924 = vrot.lane.b32.xlu0 %v922, 32
    %v925 = vpop.permute.xlu0 %924
    %v927 = vmul.f32 %v910, %v925
    %v928 = vpack.c.bf16 %v857, %v857
    %v930 = vrot.slane %v928, 2
    %v932 = vsel %vm135, %v930, 0
    %934 = vmatprep.subr.bf16.mxu0 0
    %935 = vmatpush1.bf16.msra.mxu0 0
    %936 = vmatprep.subr.bf16.mxu0 0
    %937 = vmatpush1.bf16.msra.mxu0 0
    %938 = vmatprep.subr.bf16.mxu0 0
    %939 = vmatpush1.bf16.msra.mxu0 0
    %940 = vmatprep.subr.bf16.mxu0 0
    %941 = vmatpush1.bf16.msra.mxu0 0
    %942 = vmatprep.subr.bf16.mxu0 %v126
    %943 = vmatpush1.bf16.msra.mxu0 %v125
    %944 = vmatprep.subr.bf16.mxu0 %v124
    %945 = vmatpush1.bf16.msra.mxu0 %v123
    %946 = vmatprep.subr.bf16.mxu0 %v122
    %947 = vmatpush1.bf16.msra.mxu0 %v121
    %948 = vmatprep.subr.bf16.mxu0 %v120
    %949 = vmatpush1.bf16.msra.mxu0 %v119
    %950 = vmatprep.subr.bf16.mxu0 0
    %951 = vmatpush2.bf16.msra.mxu0 0
    %952 = vmatprep.subr.bf16.mxu0 0
    %953 = vmatpush2.bf16.msra.mxu0 0
    %954 = vmatprep.subr.bf16.mxu0 0
    %955 = vmatpush2.bf16.msra.mxu0 0
    %956 = vmatprep.subr.bf16.mxu0 0
    %957 = vmatpush2.bf16.msra.mxu0 0
    %958 = vmatprep.subr.bf16.mxu0 0
    %959 = vmatpush2.bf16.msra.mxu0 0
    %960 = vmatprep.subr.bf16.mxu0 0
    %961 = vmatpush2.bf16.msra.mxu0 0
    %962 = vmatprep.subr.bf16.mxu0 0
    %963 = vmatpush2.bf16.msra.mxu0 0
    %964 = vmatprep.subr.bf16.mxu0 0
    %965 = vmatpush2.bf16.msra.mxu0 0
    %966 = vmatprep.mubr.bf16.mxu0 0
    %967 = vmatmul.mubr.bf16.gmra.mxu0 %v932
    %v968 = vpop.f32.mrf.mxu0
    %v969 = vadd.f32 0.0, %v968
    %v970 = vpop.f32.mrf.mxu0
    %v971 = vadd.f32 0.0, %v970
    %v972 = vpop.f32.mrf.mxu0
    %v973 = vpop.f32.mrf.mxu0
    %974 = vdwg.mxu0
    %v977 = vrot.slane %v969, 3
    %v978 = vrot.slane %v971, 3
    %v981 = vadd.f32 %v85, %v977
    %v982 = vadd.f32 %v86, %v978
    %v983 = vtanh.pop %v981
    %v984 = vtanh.pop %v982
    %v985 = vmul.f32 %v983, 0.5
    %v986 = vmul.f32 %v984, 0.5
    %v987 = vadd.f32 %v985, 0.5
    %v988 = vadd.f32 %v986, 0.5
    %v990 = vrot.slane %v851, 7
    %v992 = vmul.f32 %v987, %v990
    %994 = vrot.lane.b32.xlu0 %v984, 64
    %v995 = vpop.permute.xlu0 %994
    %v997 = vmul.f32 %v987, %v995
    %999 = vrot.lane.b32.xlu0 %v997, 64
    %v1000 = vpop.permute.xlu0 %999
    %v1002 = vadd.f32 %v992, %v1000
    %v1003 = vtanh.pop %v1002
    %1005 = vrot.lane.b32.xlu0 %v1003, 64
    %v1006 = vpop.permute.xlu0 %1005
    %v1008 = vmul.f32 %v988, %v1006
    %v1010 = vrot.slane %v927, 3
    %v1012 = vsel %vm135, %v1008, %v1010
    %v1013 = vpack.c.bf16 %v1012, %v1012
    %v1015 = vshrl.u32 %v1013, 16
    %v1017 = vrot.slane %v1015, 2
    %v1019 = vsel %vm256, %v1017, 0
    %1021 = vmatprep.subr.bf16.mxu0 0
    %1022 = vmatpush1.bf16.msra.mxu0 0
    %1023 = vmatprep.subr.bf16.mxu0 0
    %1024 = vmatpush1.bf16.msra.mxu0 0
    %1025 = vmatprep.subr.bf16.mxu0 0
    %1026 = vmatpush1.bf16.msra.mxu0 %v249
    %1027 = vmatprep.subr.bf16.mxu0 0
    %1028 = vmatpush1.bf16.msra.mxu0 %v248
    %1029 = vmatprep.subr.bf16.mxu0 0
    %1030 = vmatpush1.bf16.msra.mxu0 %v247
    %1031 = vmatprep.subr.bf16.mxu0 0
    %1032 = vmatpush1.bf16.msra.mxu0 %v246
    %1033 = vmatprep.subr.bf16.mxu0 0
    %1034 = vmatpush1.bf16.msra.mxu0 %v245
    %1035 = vmatprep.subr.bf16.mxu0 0
    %1036 = vmatpush1.bf16.msra.mxu0 %v244
    %1037 = vmatprep.subr.bf16.mxu0 0
    %1038 = vmatpush2.bf16.msra.mxu0 0
    %1039 = vmatprep.subr.bf16.mxu0 0
    %1040 = vmatpush2.bf16.msra.mxu0 0
    %1041 = vmatprep.subr.bf16.mxu0 0
    %1042 = vmatpush2.bf16.msra.mxu0 0
    %1043 = vmatprep.subr.bf16.mxu0 0
    %1044 = vmatpush2.bf16.msra.mxu0 0
    %1045 = vmatprep.subr.bf16.mxu0 0
    %1046 = vmatpush2.bf16.msra.mxu0 0
    %1047 = vmatprep.subr.bf16.mxu0 0
    %1048 = vmatpush2.bf16.msra.mxu0 0
    %1049 = vmatprep.subr.bf16.mxu0 0
    %1050 = vmatpush2.bf16.msra.mxu0 0
    %1051 = vmatprep.subr.bf16.mxu0 0
    %1052 = vmatpush2.bf16.msra.mxu0 0
    %1053 = vmatprep.mubr.bf16.mxu0 0
    %1054 = vmatmul.mubr.bf16.gmra.mxu0 %v1019
    %v1055 = vpop.f32.mrf.mxu0
    %v1056 = vadd.f32 %v219, %v1055
    %v1057 = vpop.f32.mrf.mxu0
    %v1058 = vpop.f32.mrf.mxu0
    %v1059 = vpop.f32.mrf.mxu0
    %1060 = vdwg.mxu0
    %v1061 = vtanh.pop %v1056
    %v1062 = vmul.f32 %v1061, 0.5
    %v1063 = vadd.f32 %v1062, 0.5
    %v1064 = vmul.f32 %v1063, %v921
    %1066 = vrot.lane.b32.xlu0 %v1061, 32
    %v1067 = vpop.permute.xlu0 %1066
    %v1069 = vmul.f32 %v1063, %v1067
    %1071 = vrot.lane.b32.xlu0 %v1069, 32
    %v1072 = vpop.permute.xlu0 %1071
    %v1074 = vadd.f32 %v1064, %v1072
    %v1075 = vtanh.pop %v1074
    %1077 = vrot.lane.b32.xlu0 %v1075, 32
    %v1078 = vpop.permute.xlu0 %1077
    %v1080 = vmul.f32 %v1063, %v1078
    %v1081 = vpack.c.bf16 %v1008, %v1008
    %v1083 = vshrl.u32 %v1081, 16
    %v1085 = vrot.slane %v1083, 2
    %v1087 = vsel %vm135, %v1085, 0
    %1089 = vmatprep.subr.bf16.mxu0 0
    %1090 = vmatpush1.bf16.msra.mxu0 0
    %1091 = vmatprep.subr.bf16.mxu0 0
    %1092 = vmatpush1.bf16.msra.mxu0 0
    %1093 = vmatprep.subr.bf16.mxu0 0
    %1094 = vmatpush1.bf16.msra.mxu0 0
    %1095 = vmatprep.subr.bf16.mxu0 0
    %1096 = vmatpush1.bf16.msra.mxu0 0
    %1097 = vmatprep.subr.bf16.mxu0 %v126
    %1098 = vmatpush1.bf16.msra.mxu0 %v125
    %1099 = vmatprep.subr.bf16.mxu0 %v124
    %1100 = vmatpush1.bf16.msra.mxu0 %v123
    %1101 = vmatprep.subr.bf16.mxu0 %v122
    %1102 = vmatpush1.bf16.msra.mxu0 %v121
    %1103 = vmatprep.subr.bf16.mxu0 %v120
    %1104 = vmatpush1.bf16.msra.mxu0 %v119
    %1105 = vmatprep.subr.bf16.mxu0 0
    %1106 = vmatpush2.bf16.msra.mxu0 0
    %1107 = vmatprep.subr.bf16.mxu0 0
    %1108 = vmatpush2.bf16.msra.mxu0 0
    %1109 = vmatprep.subr.bf16.mxu0 0
    %1110 = vmatpush2.bf16.msra.mxu0 0
    %1111 = vmatprep.subr.bf16.mxu0 0
    %1112 = vmatpush2.bf16.msra.mxu0 0
    %1113 = vmatprep.subr.bf16.mxu0 0
    %1114 = vmatpush2.bf16.msra.mxu0 0
    %1115 = vmatprep.subr.bf16.mxu0 0
    %1116 = vmatpush2.bf16.msra.mxu0 0
    %1117 = vmatprep.subr.bf16.mxu0 0
    %1118 = vmatpush2.bf16.msra.mxu0 0
    %1119 = vmatprep.subr.bf16.mxu0 0
    %1120 = vmatpush2.bf16.msra.mxu0 0
    %1121 = vmatprep.mubr.bf16.mxu0 0
    %1122 = vmatmul.mubr.bf16.gmra.mxu0 %v1087
    %v1123 = vpop.f32.mrf.mxu0
    %v1124 = vadd.f32 0.0, %v1123
    %v1125 = vpop.f32.mrf.mxu0
    %v1126 = vadd.f32 0.0, %v1125
    %v1127 = vpop.f32.mrf.mxu0
    %v1128 = vpop.f32.mrf.mxu0
    %1129 = vdwg.mxu0
    %v1132 = vrot.slane %v1124, 2
    %v1133 = vrot.slane %v1126, 2
    %v1136 = vadd.f32 %v85, %v1132
    %v1137 = vadd.f32 %v86, %v1133
    %v1138 = vtanh.pop %v1136
    %v1139 = vtanh.pop %v1137
    %v1140 = vmul.f32 %v1138, 0.5
    %v1141 = vmul.f32 %v1139, 0.5
    %v1142 = vadd.f32 %v1140, 0.5
    %v1143 = vadd.f32 %v1141, 0.5
    %v1145 = vrot.slane %v1002, 7
    %v1147 = vmul.f32 %v1142, %v1145
    %1149 = vrot.lane.b32.xlu0 %v1139, 64
    %v1150 = vpop.permute.xlu0 %1149
    %v1152 = vmul.f32 %v1142, %v1150
    %1154 = vrot.lane.b32.xlu0 %v1152, 64
    %v1155 = vpop.permute.xlu0 %1154
    %v1157 = vadd.f32 %v1147, %v1155
    %v1158 = vtanh.pop %v1157
    %1160 = vrot.lane.b32.xlu0 %v1158, 64
    %v1161 = vpop.permute.xlu0 %1160
    %v1163 = vmul.f32 %v1143, %v1161
    %v1165 = vrot.slane %v1080, 2
    %v1167 = vsel %vm135, %v1163, %v1165
    %v1168 = vpack.c.bf16 %v1167, %v1167
    %v1170 = vrot.slane %v1168, 3
    %v1172 = vsel %vm256, %v1170, 0
    %1174 = vmatprep.subr.bf16.mxu0 0
    %1175 = vmatpush1.bf16.msra.mxu0 0
    %1176 = vmatprep.subr.bf16.mxu0 0
    %1177 = vmatpush1.bf16.msra.mxu0 0
    %1178 = vmatprep.subr.bf16.mxu0 0
    %1179 = vmatpush1.bf16.msra.mxu0 %v249
    %1180 = vmatprep.subr.bf16.mxu0 0
    %1181 = vmatpush1.bf16.msra.mxu0 %v248
    %1182 = vmatprep.subr.bf16.mxu0 0
    %1183 = vmatpush1.bf16.msra.mxu0 %v247
    %1184 = vmatprep.subr.bf16.mxu0 0
    %1185 = vmatpush1.bf16.msra.mxu0 %v246
    %1186 = vmatprep.subr.bf16.mxu0 0
    %1187 = vmatpush1.bf16.msra.mxu0 %v245
    %1188 = vmatprep.subr.bf16.mxu0 0
    %1189 = vmatpush1.bf16.msra.mxu0 %v244
    %1190 = vmatprep.subr.bf16.mxu0 0
    %1191 = vmatpush2.bf16.msra.mxu0 0
    %1192 = vmatprep.subr.bf16.mxu0 0
    %1193 = vmatpush2.bf16.msra.mxu0 0
    %1194 = vmatprep.subr.bf16.mxu0 0
    %1195 = vmatpush2.bf16.msra.mxu0 0
    %1196 = vmatprep.subr.bf16.mxu0 0
    %1197 = vmatpush2.bf16.msra.mxu0 0
    %1198 = vmatprep.subr.bf16.mxu0 0
    %1199 = vmatpush2.bf16.msra.mxu0 0
    %1200 = vmatprep.subr.bf16.mxu0 0
    %1201 = vmatpush2.bf16.msra.mxu0 0
    %1202 = vmatprep.subr.bf16.mxu0 0
    %1203 = vmatpush2.bf16.msra.mxu0 0
    %1204 = vmatprep.subr.bf16.mxu0 0
    %1205 = vmatpush2.bf16.msra.mxu0 0
    %1206 = vmatprep.mubr.bf16.mxu0 0
    %1207 = vmatmul.mubr.bf16.gmra.mxu0 %v1172
    %v1208 = vpop.f32.mrf.mxu0
    %v1209 = vadd.f32 %v219, %v1208
    %v1210 = vpop.f32.mrf.mxu0
    %v1211 = vpop.f32.mrf.mxu0
    %v1212 = vpop.f32.mrf.mxu0
    %1213 = vdwg.mxu0
    %v1214 = vtanh.pop %v1209
    %v1215 = vmul.f32 %v1214, 0.5
    %v1216 = vadd.f32 %v1215, 0.5
    %v1217 = vmul.f32 %v1216, %v1074
    %1219 = vrot.lane.b32.xlu0 %v1214, 32
    %v1220 = vpop.permute.xlu0 %1219
    %v1222 = vmul.f32 %v1216, %v1220
    %1224 = vrot.lane.b32.xlu0 %v1222, 32
    %v1225 = vpop.permute.xlu0 %1224
    %v1227 = vadd.f32 %v1217, %v1225
    %v1228 = vtanh.pop %v1227
    %1230 = vrot.lane.b32.xlu0 %v1228, 32
    %v1231 = vpop.permute.xlu0 %1230
    %v1233 = vmul.f32 %v1216, %v1231
    %v1234 = vpack.c.bf16 %v1163, %v1163
    %v1236 = vrot.slane %v1234, 3
    %v1238 = vsel %vm135, %v1236, 0
    %1240 = vmatprep.subr.bf16.mxu0 0
    %1241 = vmatpush1.bf16.msra.mxu0 0
    %1242 = vmatprep.subr.bf16.mxu0 0
    %1243 = vmatpush1.bf16.msra.mxu0 0
    %1244 = vmatprep.subr.bf16.mxu0 0
    %1245 = vmatpush1.bf16.msra.mxu0 0
    %1246 = vmatprep.subr.bf16.mxu0 0
    %1247 = vmatpush1.bf16.msra.mxu0 0
    %1248 = vmatprep.subr.bf16.mxu0 %v126
    %1249 = vmatpush1.bf16.msra.mxu0 %v125
    %1250 = vmatprep.subr.bf16.mxu0 %v124
    %1251 = vmatpush1.bf16.msra.mxu0 %v123
    %1252 = vmatprep.subr.bf16.mxu0 %v122
    %1253 = vmatpush1.bf16.msra.mxu0 %v121
    %1254 = vmatprep.subr.bf16.mxu0 %v120
    %1255 = vmatpush1.bf16.msra.mxu0 %v119
    %1256 = vmatprep.subr.bf16.mxu0 0
    %1257 = vmatpush2.bf16.msra.mxu0 0
    %1258 = vmatprep.subr.bf16.mxu0 0
    %1259 = vmatpush2.bf16.msra.mxu0 0
    %1260 = vmatprep.subr.bf16.mxu0 0
    %1261 = vmatpush2.bf16.msra.mxu0 0
    %1262 = vmatprep.subr.bf16.mxu0 0
    %1263 = vmatpush2.bf16.msra.mxu0 0
    %1264 = vmatprep.subr.bf16.mxu0 0
    %1265 = vmatpush2.bf16.msra.mxu0 0
    %1266 = vmatprep.subr.bf16.mxu0 0
    %1267 = vmatpush2.bf16.msra.mxu0 0
    %1268 = vmatprep.subr.bf16.mxu0 0
    %1269 = vmatpush2.bf16.msra.mxu0 0
    %1270 = vmatprep.subr.bf16.mxu0 0
    %1271 = vmatpush2.bf16.msra.mxu0 0
    %1272 = vmatprep.mubr.bf16.mxu0 0
    %1273 = vmatmul.mubr.bf16.gmra.mxu0 %v1238
    %v1274 = vpop.f32.mrf.mxu0
    %v1275 = vadd.f32 0.0, %v1274
    %v1276 = vpop.f32.mrf.mxu0
    %v1277 = vadd.f32 0.0, %v1276
    %v1278 = vpop.f32.mrf.mxu0
    %v1279 = vpop.f32.mrf.mxu0
    %1280 = vdwg.mxu0
    %v1283 = vrot.slane %v1275, 1
    %v1284 = vrot.slane %v1277, 1
    %v1287 = vadd.f32 %v85, %v1283
    %v1288 = vadd.f32 %v86, %v1284
    %v1289 = vtanh.pop %v1287
    %v1290 = vtanh.pop %v1288
    %v1291 = vmul.f32 %v1289, 0.5
    %v1292 = vmul.f32 %v1290, 0.5
    %v1293 = vadd.f32 %v1291, 0.5
    %v1294 = vadd.f32 %v1292, 0.5
    %v1296 = vrot.slane %v1157, 7
    %v1298 = vmul.f32 %v1293, %v1296
    %1300 = vrot.lane.b32.xlu0 %v1290, 64
    %v1301 = vpop.permute.xlu0 %1300
    %v1303 = vmul.f32 %v1293, %v1301
    %1305 = vrot.lane.b32.xlu0 %v1303, 64
    %v1306 = vpop.permute.xlu0 %1305
    %v1308 = vadd.f32 %v1298, %v1306
    %v1309 = vtanh.pop %v1308
    %1311 = vrot.lane.b32.xlu0 %v1309, 64
    %v1312 = vpop.permute.xlu0 %1311
    %v1314 = vmul.f32 %v1294, %v1312
    %v1316 = vrot.slane %v1233, 1
    %v1318 = vsel %vm135, %v1314, %v1316
    %v1319 = vpack.c.bf16 %v1318, %v1318
    %v1321 = vshrl.u32 %v1319, 16
    %v1323 = vrot.slane %v1321, 3
    %v1325 = vsel %vm256, %v1323, 0
    %1327 = vmatprep.subr.bf16.mxu0 0
    %1328 = vmatpush1.bf16.msra.mxu0 0
    %1329 = vmatprep.subr.bf16.mxu0 0
    %1330 = vmatpush1.bf16.msra.mxu0 0
    %1331 = vmatprep.subr.bf16.mxu0 0
    %1332 = vmatpush1.bf16.msra.mxu0 %v249
    %1333 = vmatprep.subr.bf16.mxu0 0
    %1334 = vmatpush1.bf16.msra.mxu0 %v248
    %1335 = vmatprep.subr.bf16.mxu0 0
    %1336 = vmatpush1.bf16.msra.mxu0 %v247
    %1337 = vmatprep.subr.bf16.mxu0 0
    %1338 = vmatpush1.bf16.msra.mxu0 %v246
    %1339 = vmatprep.subr.bf16.mxu0 0
    %1340 = vmatpush1.bf16.msra.mxu0 %v245
    %1341 = vmatprep.subr.bf16.mxu0 0
    %1342 = vmatpush1.bf16.msra.mxu0 %v244
    %1343 = vmatprep.subr.bf16.mxu0 0
    %1344 = vmatpush2.bf16.msra.mxu0 0
    %1345 = vmatprep.subr.bf16.mxu0 0
    %1346 = vmatpush2.bf16.msra.mxu0 0
    %1347 = vmatprep.subr.bf16.mxu0 0
    %1348 = vmatpush2.bf16.msra.mxu0 0
    %1349 = vmatprep.subr.bf16.mxu0 0
    %1350 = vmatpush2.bf16.msra.mxu0 0
    %1351 = vmatprep.subr.bf16.mxu0 0
    %1352 = vmatpush2.bf16.msra.mxu0 0
    %1353 = vmatprep.subr.bf16.mxu0 0
    %1354 = vmatpush2.bf16.msra.mxu0 0
    %1355 = vmatprep.subr.bf16.mxu0 0
    %1356 = vmatpush2.bf16.msra.mxu0 0
    %1357 = vmatprep.subr.bf16.mxu0 0
    %1358 = vmatpush2.bf16.msra.mxu0 0
    %1359 = vmatprep.mubr.bf16.mxu0 0
    %1360 = vmatmul.mubr.bf16.gmra.mxu0 %v1325
    %v1361 = vpop.f32.mrf.mxu0
    %v1362 = vadd.f32 %v219, %v1361
    %v1363 = vpop.f32.mrf.mxu0
    %v1364 = vpop.f32.mrf.mxu0
    %v1365 = vpop.f32.mrf.mxu0
    %1366 = vdwg.mxu0
    %v1367 = vtanh.pop %v1362
    %v1368 = vmul.f32 %v1367, 0.5
    %v1369 = vadd.f32 %v1368, 0.5
    %v1370 = vmul.f32 %v1369, %v1227
    %1372 = vrot.lane.b32.xlu0 %v1367, 32
    %v1373 = vpop.permute.xlu0 %1372
    %v1375 = vmul.f32 %v1369, %v1373
    %1377 = vrot.lane.b32.xlu0 %v1375, 32
    %v1378 = vpop.permute.xlu0 %1377
    %v1380 = vadd.f32 %v1370, %v1378
    %v1381 = vtanh.pop %v1380
    %1383 = vrot.lane.b32.xlu0 %v1381, 32
    %v1384 = vpop.permute.xlu0 %1383
    %v1386 = vmul.f32 %v1369, %v1384
    %1388 = vrot.lane.b32.xlu0 %v1386, 64
    %v1389 = vpop.permute.xlu0 %1388
    %vm1391 = vcmask 253952
    %1392 = vst.msk [vmem:[#allocation7] sm:$0x1] %vm1391, %v1389
    // Predicated region
    $region34: #{tpu_custom_call.1} parent=1 // pred_check
      _
    $region35: #{tpu_custom_call.1} parent=1 // pred_check_branch
      %1394 = sbr.rel (0) target = $region37
    $region36: #{tpu_custom_call.1} parent=1 // pred_region
      %s1396 = ssub.s32 16, 16
      %1397 = vsyncadd [#allocation4], %s1396
      %s1399 = sshll.u32 [#allocation7], 4
      %s1400 = int_to_ptr.vmem [resolvable:$true] %s1399
      %1402 = dma.vmem_to_hbm [thread:$0]  %s1400, 16, %s6, [#allocation4]
    $region37: #{tpu_custom_call.1} parent=1 // pred_fallthru
      _
    // Predicated region
    $region38: #{tpu_custom_call.1} parent=1 // pred_check
      _
    $region39: #{tpu_custom_call.1} parent=1 // pred_check_branch
      %1404 = sbr.rel (0) target = $region41
    $region40: #{tpu_custom_call.1} parent=1 // pred_region
      %1405 = dma.done [#allocation4], 16
    $region41: #{tpu_custom_call.1} parent=1 // pred_fallthru
      _
    %1406 = vsyncpa [#allocation3], 1
    %1407 = vsyncpa [#allocation6], 1
    %1408 = vsyncpa [#allocation4], 1

</llo_original>
